<compile_context>
chip_gen: v6e
topology: v6e:2x2x1
jax: 0.10.0
libtpu: 0.0.40
codegen_flags: <defaults>
</compile_context>

<pallas_src>
import functools

import jax
import jax.numpy as jnp
from jax.experimental import pallas as pl
from jax.experimental.pallas import tpu as pltpu

_LANE = 128
_SUBLANE = 8
_VPU_LAYER0_MAX_FANIN = 8  # below this, layer 0 is cheaper on the VPU than the MXU


def _round_up(n, m):
    return ((n + m - 1) // m) * m


def _mlp_kernel(n_layers, vpu_layer0, *refs):
    """refs = (x_ref, w0_ref, b0_ref, ..., w{L-1}_ref, b{L-1}_ref, o_ref)."""
    x_ref = refs[0]
    o_ref = refs[-1]
    wb = refs[1:-1]

    if vpu_layer0:
        # Tiny-fan-in first layer on the VPU: broadcast multiply-adds instead of
        # an MXU pass with K = insize <= 8. Kept in f32 (padded lanes stay 0).
        x = x_ref[...]                                  # (TB, insize) f32
        w0 = wb[0][...]                                 # (insize, H0_pad) f32
        b0 = wb[1][...]                                 # (1, H0_pad) f32
        h = b0 + x[:, 0:1] * w0[0:1, :]
        for k in range(1, x.shape[1]):                  # statically unrolled
            h = h + x[:, k:k + 1] * w0[k:k + 1, :]
        if n_layers > 1:
            h = jnp.tanh(h)
        start = 1
    else:
        h = x_ref[...]
        start = 0

    for i in range(start, n_layers):
        w = wb[2 * i][...]                              # (fan_in_pad, fan_out_pad)
        b = wb[2 * i + 1][...]                          # (1, fan_out_pad) f32
        # MXU matmul: (optionally) bf16 inputs, always f32 accumulation; bias
        # add and tanh stay in f32 on the VPU/EUP.
        h = jnp.dot(h.astype(w.dtype), w, preferred_element_type=jnp.float32) + b
        if i < n_layers - 1:
            h = jnp.tanh(h)

    o_ref[...] = h.astype(o_ref.dtype)


def _vmem_limit_bytes():
    # Generation-aware scoped-VMEM limit: ~75% of physical, capped at 96 MiB
    # (v5e/v6e: 128 MiB physical -> 96 MiB; v7x: 64 MiB physical -> 48 MiB).
    try:
        phys = int(pltpu.get_tpu_info().vmem_capacity_bytes)
    except Exception:
        phys = 64 * 1024 * 1024  # conservative (v7x-sized) fallback
    return min((phys * 3) // 4, 96 * 1024 * 1024)


def mlp_forward(x, weights, biases, *, block_batch=4096, use_bf16_mxu=True):
    """Fused MLP forward.

    x: (B, insize) f32; weights[i]: (fan_in_i, fan_out_i) f32 (pre-transposed);
    biases[i]: (1, fan_out_i) f32.

    block_batch: target batch-tile rows. For large PINN batches sweep 2048-8192;
      it is automatically capped by the VMEM budget and by B.
    use_bf16_mxu: feed bf16 into the MXU (f32 accumulation). Big win on v6e/v7x,
      moderate on v5e; outputs then match the f32 reference only to ~1e-2.
    """
    n_layers = len(weights)
    B, insize = x.shape
    outsize = weights[-1].shape[1]
    vpu_layer0 = insize <= _VPU_LAYER0_MAX_FANIN

    # --- Pad every fan_out (including the last: lane-dense output writeback)
    # and every fan_in except layer 0 (x stays narrow in HBM) up to 128 lanes.
    # Zero padding keeps padded lanes exactly 0 through tanh -> math unchanged.
    padded_w, padded_b = [], []
    for i, (w, b) in enumerate(zip(weights, biases)):
        fan_in, fan_out = w.shape
        in_pad = fan_in if i == 0 else _round_up(fan_in, _LANE)
        out_pad = _round_up(fan_out, _LANE)
        wp = jnp.zeros((in_pad, out_pad), jnp.float32).at[:fan_in, :fan_out].set(w)
        bp = jnp.zeros((1, out_pad), jnp.float32).at[:, :fan_out].set(b)
        if use_bf16_mxu and not (i == 0 and vpu_layer0):
            wp = wp.astype(jnp.bfloat16)   # MXU inputs; biases stay f32 (VPU add)
        padded_w.append(wp)
        padded_b.append(bp)
    OUT_PAD = padded_w[-1].shape[1]
    max_pad = max(w.shape[1] for w in padded_w)

    vmem_limit = _vmem_limit_bytes()

    # --- Batch tile: as large as the VMEM budget allows (per-step overhead
    # ~0.35us and tiny x-tile DMAs are pure overhead), but >= ~4 grid steps for
    # large batches so both v7x TensorCores get work.
    wb_bytes = sum(int(w.size) * w.dtype.itemsize + int(b.size) * b.dtype.itemsize
                   for w, b in zip(padded_w, padded_b))
    act_itemsize = 2 if use_bf16_mxu else 4
    per_row_bytes = (2 * insize * 4            # x tile, double-buffered
                     + 2 * OUT_PAD * 4         # out tile, double-buffered
                     + 3 * max_pad * 4         # live f32 intermediates
                     + max_pad * act_itemsize)  # bf16 cast copy fed to the MXU
    budget = vmem_limit - 2 * wb_bytes - (2 << 20)   # headroom
    tb_cap = max(_SUBLANE, (budget // per_row_bytes) // _SUBLANE * _SUBLANE)

    if B <= _SUBLANE:
        TB = B
    else:
        TB = min(block_batch, B, tb_cap)
        if B >= 4 * _SUBLANE:
            TB = min(TB, _round_up(pl.cdiv(B, 4), _SUBLANE))
        TB = max(_SUBLANE, (TB // _SUBLANE) * _SUBLANE)
    B_pad = _round_up(B, TB)
    x_in = x if B_pad == B else jnp.pad(x, ((0, B_pad - B), (0, 0)))
    grid = (B_pad // TB,)

    operands = [x_in]
    for w, b in zip(padded_w, padded_b):
        operands.append(w)
        operands.append(b)

    # Advisory cost estimate (true unpadded flops; actual HBM bytes).
    flops = 2 * B * sum(int(w.shape[0]) * int(w.shape[1]) for w in weights)
    transcendentals = B * sum(int(w.shape[1]) for w in weights[:-1])
    bytes_accessed = 4 * int(x.size) + 4 * B_pad * OUT_PAD + wb_bytes

    kernel = functools.partial(_mlp_kernel, n_layers, vpu_layer0)

    def _const_spec(shape, single_buffer):
        # Constant index_map -> block stays VMEM-resident across all batch
        # tiles; single-buffering halves the resident weight footprint.
        if single_buffer:
            return pl.BlockSpec(shape, lambda i: (0, 0),
                                pipeline_mode=pl.Buffered(1))
        return pl.BlockSpec(shape, lambda i: (0, 0))

    def _run(single_buffer_weights):
        in_specs = [pl.BlockSpec((TB, insize), lambda i: (i, 0))]
        for w, b in zip(padded_w, padded_b):
            in_specs.append(_const_spec(w.shape, single_buffer_weights))
            in_specs.append(_const_spec(b.shape, single_buffer_weights))
        out_specs = pl.BlockSpec((TB, OUT_PAD), lambda i: (i, 0))
        return pl.pallas_call(
            kernel,
            grid=grid,
            in_specs=in_specs,
            out_specs=out_specs,
            out_shape=jax.ShapeDtypeStruct((B_pad, OUT_PAD), jnp.float32),
            compiler_params=pltpu.CompilerParams(
                dimension_semantics=("parallel",),   # megacore sharding on v7x
                vmem_limit_bytes=vmem_limit,
            ),
            cost_estimate=pl.CostEstimate(
                flops=flops,
                transcendentals=transcendentals,
                bytes_accessed=bytes_accessed,
            ),
        )(*operands)

    try:
        out_padded = _run(True)
    except Exception:
        # Some jax versions reject pipeline_mode=pl.Buffered(1) on a
        # pallas_call BlockSpec; results are identical without it.
        out_padded = _run(False)

    # TODO(synk): for multi-million-row batches on v5e, a reshaped lane-dense
    # output slab (viewing B_pad*outsize as (-1, 128)) avoids the 64x write
    # inflation of padding outsize->128; on v6e/v7x the padded write is cheap.
    return out_padded[:B, :outsize]


def init_mlp_params(key, insize, outsize, hsizes):
    """Deterministic init mimicking nn.Linear's U(-1/sqrt(fan_in), 1/sqrt(fan_in))."""
    layer_sizes = [insize] + list(hsizes) + [outsize]
    weights, biases = [], []
    for i in range(len(layer_sizes) - 1):
        fan_in, fan_out = layer_sizes[i], layer_sizes[i + 1]
        key, kw, kb = jax.random.split(key, 3)
        bound = 1.0 / jnp.sqrt(jnp.float32(fan_in))
        # stored already transposed to (fan_in, fan_out)
        w = jax.random.uniform(kw, (fan_in, fan_out), jnp.float32, -bound, bound)
        b = jax.random.uniform(kb, (1, fan_out), jnp.float32, -bound, bound)
        weights.append(w)
        biases.append(b)
    return weights, biases


def mlp_reference(x, weights, biases):
    h = x
    for i, (w, b) in enumerate(zip(weights, biases)):
        h = jnp.dot(h, w, precision=jax.lax.Precision.HIGHEST) + b
        if i < len(weights) - 1:
            h = jnp.tanh(h)
    return h


if __name__ == "__main__":
    key = jax.random.PRNGKey(0)

    # Config 1: VanillaPINN-style MLP with tiny fan-in (VPU layer-0 path).
    insize, outsize, hsizes = 4, 2, [32, 32]
    key, sub = jax.random.split(key)
    weights, biases = init_mlp_params(sub, insize, outsize, hsizes)

    key, kx = jax.random.split(key)
    x_big = jax.random.normal(kx, (512, insize), jnp.float32)
    ref_big = mlp_reference(x_big, weights, biases)

    # 1a: f32 MXU path, multi-tile grid (TB=128 -> 4 grid steps).
    out_f32 = jax.block_until_ready(
        mlp_forward(x_big, weights, biases, block_batch=128, use_bf16_mxu=False))
    assert out_f32.shape == (512, outsize)
    # Tolerance allows for matmul-precision differences between the XLA
    # reference and the in-kernel MXU path.
    assert jnp.allclose(out_f32, ref_big, atol=1e-2, rtol=1e-2)

    # 1b: default bf16-MXU-input / f32-accumulate path, relaxed tolerance.
    out_bf16 = jax.block_until_ready(
        mlp_forward(x_big, weights, biases, block_batch=128))
    assert out_bf16.shape == (512, outsize)
    assert jnp.allclose(out_bf16, ref_big, atol=5e-2, rtol=5e-2)

    # Config 2: tiny batch, single-tile ragged-safe path.
    key, kx2 = jax.random.split(key)
    x_small = jax.random.normal(kx2, (8, insize), jnp.float32)
    out_small = jax.block_until_ready(mlp_forward(x_small, weights, biases))
    assert out_small.shape == (8, outsize)
    assert jnp.allclose(out_small, mlp_reference(x_small, weights, biases),
                        atol=5e-2, rtol=5e-2)

    # Config 3: wider fan-in (layer 0 on the MXU) + non-multiple-of-128 outsize.
    insize2, outsize2, hsizes2 = 16, 3, [64]
    key, sub2 = jax.random.split(key)
    w2, b2 = init_mlp_params(sub2, insize2, outsize2, hsizes2)
    key, kx3 = jax.random.split(key)
    x3 = jax.random.normal(kx3, (64, insize2), jnp.float32)
    out3 = jax.block_until_ready(mlp_forward(x3, w2, b2))
    assert out3.shape == (64, outsize2)
    assert jnp.allclose(out3, mlp_reference(x3, w2, b2), atol=5e-2, rtol=5e-2)

    print("KERNEL_OK")
</pallas_src>

<mosaic_0001>
module attributes {stable_mosaic.version = 11 : i64} {
  func.func @_mlp_kernel(%arg0: i32, %arg1: memref<128x4xf32, #tpu.memory_space<vmem>>, %arg2: memref<4x128xf32, #tpu.memory_space<vmem>>, %arg3: memref<1x128xf32, #tpu.memory_space<vmem>>, %arg4: memref<128x128xf32, #tpu.memory_space<vmem>>, %arg5: memref<1x128xf32, #tpu.memory_space<vmem>>, %arg6: memref<128x128xf32, #tpu.memory_space<vmem>>, %arg7: memref<1x128xf32, #tpu.memory_space<vmem>>, %arg8: memref<128x128xf32, #tpu.memory_space<vmem>>) attributes {dimension_semantics = [#tpu.dimension_semantics<parallel>], iteration_bounds = array<i64: 4>, scalar_prefetch = 0 : i64, scratch_operands = 0 : i64, tpu.core_type = #tpu.core_type<tc>, window_params = [{transform_indices = @transform_0, window_bounds = array<i64: 128, 4>}, {pipeline_mode = #tpu.pipeline_mode<synchronous>, transform_indices = @transform_1, window_bounds = array<i64: 4, 128>}, {pipeline_mode = #tpu.pipeline_mode<synchronous>, transform_indices = @transform_2, window_bounds = array<i64: 1, 128>}, {pipeline_mode = #tpu.pipeline_mode<synchronous>, transform_indices = @transform_3, window_bounds = array<i64: 128, 128>}, {pipeline_mode = #tpu.pipeline_mode<synchronous>, transform_indices = @transform_4, window_bounds = array<i64: 1, 128>}, {pipeline_mode = #tpu.pipeline_mode<synchronous>, transform_indices = @transform_5, window_bounds = array<i64: 128, 128>}, {pipeline_mode = #tpu.pipeline_mode<synchronous>, transform_indices = @transform_6, window_bounds = array<i64: 1, 128>}, {transform_indices = @transform_7, window_bounds = array<i64: 128, 128>}]} {
    %c0 = arith.constant 0 : index
    %c0_0 = arith.constant 0 : index
    %0 = vector.load %arg1[%c0, %c0_0] : memref<128x4xf32, #tpu.memory_space<vmem>>, vector<128x4xf32>
    %c0_1 = arith.constant 0 : index
    %c0_2 = arith.constant 0 : index
    %1 = vector.load %arg2[%c0_1, %c0_2] : memref<4x128xf32, #tpu.memory_space<vmem>>, vector<4x128xf32>
    %c0_3 = arith.constant 0 : index
    %c0_4 = arith.constant 0 : index
    %2 = vector.load %arg3[%c0_3, %c0_4] : memref<1x128xf32, #tpu.memory_space<vmem>>, vector<1x128xf32>
    %3 = vector.extract_strided_slice %0 {offsets = [0, 0], sizes = [128, 1], strides = [1, 1]} : vector<128x4xf32> to vector<128x1xf32>
    %4 = vector.extract_strided_slice %1 {offsets = [0, 0], sizes = [1, 128], strides = [1, 1]} : vector<4x128xf32> to vector<1x128xf32>
    %5 = vector.broadcast %3 : vector<128x1xf32> to vector<128x128xf32>
    %6 = vector.broadcast %4 : vector<1x128xf32> to vector<128x128xf32>
    %7 = arith.mulf %5, %6 : vector<128x128xf32>
    %8 = vector.broadcast %2 : vector<1x128xf32> to vector<128x128xf32>
    %9 = arith.addf %8, %7 : vector<128x128xf32>
    %10 = vector.extract_strided_slice %0 {offsets = [0, 1], sizes = [128, 1], strides = [1, 1]} : vector<128x4xf32> to vector<128x1xf32>
    %11 = vector.extract_strided_slice %1 {offsets = [1, 0], sizes = [1, 128], strides = [1, 1]} : vector<4x128xf32> to vector<1x128xf32>
    %12 = vector.broadcast %10 : vector<128x1xf32> to vector<128x128xf32>
    %13 = vector.broadcast %11 : vector<1x128xf32> to vector<128x128xf32>
    %14 = arith.mulf %12, %13 : vector<128x128xf32>
    %15 = arith.addf %9, %14 : vector<128x128xf32>
    %16 = vector.extract_strided_slice %0 {offsets = [0, 2], sizes = [128, 1], strides = [1, 1]} : vector<128x4xf32> to vector<128x1xf32>
    %17 = vector.extract_strided_slice %1 {offsets = [2, 0], sizes = [1, 128], strides = [1, 1]} : vector<4x128xf32> to vector<1x128xf32>
    %18 = vector.broadcast %16 : vector<128x1xf32> to vector<128x128xf32>
    %19 = vector.broadcast %17 : vector<1x128xf32> to vector<128x128xf32>
    %20 = arith.mulf %18, %19 : vector<128x128xf32>
    %21 = arith.addf %15, %20 : vector<128x128xf32>
    %22 = vector.extract_strided_slice %0 {offsets = [0, 3], sizes = [128, 1], strides = [1, 1]} : vector<128x4xf32> to vector<128x1xf32>
    %23 = vector.extract_strided_slice %1 {offsets = [3, 0], sizes = [1, 128], strides = [1, 1]} : vector<4x128xf32> to vector<1x128xf32>
    %24 = vector.broadcast %22 : vector<128x1xf32> to vector<128x128xf32>
    %25 = vector.broadcast %23 : vector<1x128xf32> to vector<128x128xf32>
    %26 = arith.mulf %24, %25 : vector<128x128xf32>
    %27 = arith.addf %21, %26 : vector<128x128xf32>
    %28 = math.tanh %27 : vector<128x128xf32>
    %c0_5 = arith.constant 0 : index
    %c0_6 = arith.constant 0 : index
    %29 = vector.load %arg4[%c0_5, %c0_6] : memref<128x128xf32, #tpu.memory_space<vmem>>, vector<128x128xf32>
    %c0_7 = arith.constant 0 : index
    %c0_8 = arith.constant 0 : index
    %30 = vector.load %arg5[%c0_7, %c0_8] : memref<1x128xf32, #tpu.memory_space<vmem>>, vector<1x128xf32>
    %cst = arith.constant dense<0.000000e+00> : vector<128x128xf32>
    %31 = tpu.matmul %28, %29, %cst {dimension_numbers = #tpu.dot_dimension_numbers<[1], [0], [0], [1], [0, 0, 1, 1], [], []>} : vector<128x128xf32>, vector<128x128xf32>, vector<128x128xf32> -> vector<128x128xf32>
    %32 = vector.broadcast %30 : vector<1x128xf32> to vector<128x128xf32>
    %33 = arith.addf %31, %32 : vector<128x128xf32>
    %34 = math.tanh %33 : vector<128x128xf32>
    %c0_9 = arith.constant 0 : index
    %c0_10 = arith.constant 0 : index
    %35 = vector.load %arg6[%c0_9, %c0_10] : memref<128x128xf32, #tpu.memory_space<vmem>>, vector<128x128xf32>
    %c0_11 = arith.constant 0 : index
    %c0_12 = arith.constant 0 : index
    %36 = vector.load %arg7[%c0_11, %c0_12] : memref<1x128xf32, #tpu.memory_space<vmem>>, vector<1x128xf32>
    %cst_13 = arith.constant dense<0.000000e+00> : vector<128x128xf32>
    %37 = tpu.matmul %34, %35, %cst_13 {dimension_numbers = #tpu.dot_dimension_numbers<[1], [0], [0], [1], [0, 0, 1, 1], [], []>} : vector<128x128xf32>, vector<128x128xf32>, vector<128x128xf32> -> vector<128x128xf32>
    %38 = vector.broadcast %36 : vector<1x128xf32> to vector<128x128xf32>
    %39 = arith.addf %37, %38 : vector<128x128xf32>
    %c0_14 = arith.constant 0 : index
    %c0_15 = arith.constant 0 : index
    %40 = vector.load %arg8[%c0_14, %c0_15] : memref<128x128xf32, #tpu.memory_space<vmem>>, vector<128x128xf32>
    tpu.vector_store %arg8[%c0_14, %c0_15], %39 {strides = array<i32>} : memref<128x128xf32, #tpu.memory_space<vmem>>, vector<128x128xf32>,
    return
  }
  func.func @transform_0(%arg0: i32) -> (i32, i32) {
    %c0_i32 = arith.constant 0 : i32
    %c0_i32_0 = arith.constant 0 : i32
    return %arg0, %c0_i32 : i32, i32
  }
  func.func @transform_1(%arg0: i32) -> (i32, i32) {
    %c0_i32 = arith.constant 0 : i32
    %c0_i32_0 = arith.constant 0 : i32
    %c0_i32_1 = arith.constant 0 : i32
    return %c0_i32, %c0_i32_0 : i32, i32
  }
  func.func @transform_2(%arg0: i32) -> (i32, i32) {
    %c0_i32 = arith.constant 0 : i32
    %c0_i32_0 = arith.constant 0 : i32
    %c0_i32_1 = arith.constant 0 : i32
    return %c0_i32, %c0_i32_0 : i32, i32
  }
  func.func @transform_3(%arg0: i32) -> (i32, i32) {
    %c0_i32 = arith.constant 0 : i32
    %c0_i32_0 = arith.constant 0 : i32
    %c0_i32_1 = arith.constant 0 : i32
    return %c0_i32, %c0_i32_0 : i32, i32
  }
  func.func @transform_4(%arg0: i32) -> (i32, i32) {
    %c0_i32 = arith.constant 0 : i32
    %c0_i32_0 = arith.constant 0 : i32
    %c0_i32_1 = arith.constant 0 : i32
    return %c0_i32, %c0_i32_0 : i32, i32
  }
  func.func @transform_5(%arg0: i32) -> (i32, i32) {
    %c0_i32 = arith.constant 0 : i32
    %c0_i32_0 = arith.constant 0 : i32
    %c0_i32_1 = arith.constant 0 : i32
    return %c0_i32, %c0_i32_0 : i32, i32
  }
  func.func @transform_6(%arg0: i32) -> (i32, i32) {
    %c0_i32 = arith.constant 0 : i32
    %c0_i32_0 = arith.constant 0 : i32
    %c0_i32_1 = arith.constant 0 : i32
    return %c0_i32, %c0_i32_0 : i32, i32
  }
  func.func @transform_7(%arg0: i32) -> (i32, i32) {
    %c0_i32 = arith.constant 0 : i32
    %c0_i32_0 = arith.constant 0 : i32
    return %arg0, %c0_i32 : i32, i32
  }
}

module attributes {stable_mosaic.version = 11 : i64} {
  func.func @_mlp_kernel(%arg0: i32, %arg1: memref<128x4xf32, #tpu.memory_space<vmem>>, %arg2: memref<4x128xf32, #tpu.memory_space<vmem>>, %arg3: memref<1x128xf32, #tpu.memory_space<vmem>>, %arg4: memref<128x128xf32, #tpu.memory_space<vmem>>, %arg5: memref<1x128xf32, #tpu.memory_space<vmem>>, %arg6: memref<128x128xf32, #tpu.memory_space<vmem>>, %arg7: memref<1x128xf32, #tpu.memory_space<vmem>>, %arg8: memref<128x128xf32, #tpu.memory_space<vmem>>) attributes {dimension_semantics = [#tpu.dimension_semantics<parallel>], iteration_bounds = array<i64: 4>, scalar_prefetch = 0 : i64, scratch_operands = 0 : i64, tpu.core_type = #tpu.core_type<tc>, window_params = [{transform_indices = @transform_0, window_bounds = array<i64: 128, 4>}, {pipeline_mode = #tpu.pipeline_mode<synchronous>, transform_indices = @transform_1, window_bounds = array<i64: 4, 128>}, {pipeline_mode = #tpu.pipeline_mode<synchronous>, transform_indices = @transform_2, window_bounds = array<i64: 1, 128>}, {pipeline_mode = #tpu.pipeline_mode<synchronous>, transform_indices = @transform_3, window_bounds = array<i64: 128, 128>}, {pipeline_mode = #tpu.pipeline_mode<synchronous>, transform_indices = @transform_4, window_bounds = array<i64: 1, 128>}, {pipeline_mode = #tpu.pipeline_mode<synchronous>, transform_indices = @transform_5, window_bounds = array<i64: 128, 128>}, {pipeline_mode = #tpu.pipeline_mode<synchronous>, transform_indices = @transform_6, window_bounds = array<i64: 1, 128>}, {transform_indices = @transform_7, window_bounds = array<i64: 128, 128>}]} {
    %c0 = arith.constant 0 : index
    %c0_0 = arith.constant 0 : index
    %0 = vector.load %arg1[%c0, %c0_0] : memref<128x4xf32, #tpu.memory_space<vmem>>, vector<128x4xf32>
    %c0_1 = arith.constant 0 : index
    %c0_2 = arith.constant 0 : index
    %1 = vector.load %arg2[%c0_1, %c0_2] : memref<4x128xf32, #tpu.memory_space<vmem>>, vector<4x128xf32>
    %c0_3 = arith.constant 0 : index
    %c0_4 = arith.constant 0 : index
    %2 = vector.load %arg3[%c0_3, %c0_4] : memref<1x128xf32, #tpu.memory_space<vmem>>, vector<1x128xf32>
    %3 = vector.extract_strided_slice %0 {offsets = [0, 0], sizes = [128, 1], strides = [1, 1]} : vector<128x4xf32> to vector<128x1xf32>
    %4 = vector.extract_strided_slice %1 {offsets = [0, 0], sizes = [1, 128], strides = [1, 1]} : vector<4x128xf32> to vector<1x128xf32>
    %5 = vector.broadcast %3 : vector<128x1xf32> to vector<128x128xf32>
    %6 = vector.broadcast %4 : vector<1x128xf32> to vector<128x128xf32>
    %7 = arith.mulf %5, %6 : vector<128x128xf32>
    %8 = vector.broadcast %2 : vector<1x128xf32> to vector<128x128xf32>
    %9 = arith.addf %8, %7 : vector<128x128xf32>
    %10 = vector.extract_strided_slice %0 {offsets = [0, 1], sizes = [128, 1], strides = [1, 1]} : vector<128x4xf32> to vector<128x1xf32>
    %11 = vector.extract_strided_slice %1 {offsets = [1, 0], sizes = [1, 128], strides = [1, 1]} : vector<4x128xf32> to vector<1x128xf32>
    %12 = vector.broadcast %10 : vector<128x1xf32> to vector<128x128xf32>
    %13 = vector.broadcast %11 : vector<1x128xf32> to vector<128x128xf32>
    %14 = arith.mulf %12, %13 : vector<128x128xf32>
    %15 = arith.addf %9, %14 : vector<128x128xf32>
    %16 = vector.extract_strided_slice %0 {offsets = [0, 2], sizes = [128, 1], strides = [1, 1]} : vector<128x4xf32> to vector<128x1xf32>
    %17 = vector.extract_strided_slice %1 {offsets = [2, 0], sizes = [1, 128], strides = [1, 1]} : vector<4x128xf32> to vector<1x128xf32>
    %18 = vector.broadcast %16 : vector<128x1xf32> to vector<128x128xf32>
    %19 = vector.broadcast %17 : vector<1x128xf32> to vector<128x128xf32>
    %20 = arith.mulf %18, %19 : vector<128x128xf32>
    %21 = arith.addf %15, %20 : vector<128x128xf32>
    %22 = vector.extract_strided_slice %0 {offsets = [0, 3], sizes = [128, 1], strides = [1, 1]} : vector<128x4xf32> to vector<128x1xf32>
    %23 = vector.extract_strided_slice %1 {offsets = [3, 0], sizes = [1, 128], strides = [1, 1]} : vector<4x128xf32> to vector<1x128xf32>
    %24 = vector.broadcast %22 : vector<128x1xf32> to vector<128x128xf32>
    %25 = vector.broadcast %23 : vector<1x128xf32> to vector<128x128xf32>
    %26 = arith.mulf %24, %25 : vector<128x128xf32>
    %27 = arith.addf %21, %26 : vector<128x128xf32>
    %28 = math.tanh %27 : vector<128x128xf32>
    %c0_5 = arith.constant 0 : index
    %c0_6 = arith.constant 0 : index
    %29 = vector.load %arg4[%c0_5, %c0_6] : memref<128x128xf32, #tpu.memory_space<vmem>>, vector<128x128xf32>
    %c0_7 = arith.constant 0 : index
    %c0_8 = arith.constant 0 : index
    %30 = vector.load %arg5[%c0_7, %c0_8] : memref<1x128xf32, #tpu.memory_space<vmem>>, vector<1x128xf32>
    %cst = arith.constant dense<0.000000e+00> : vector<128x128xf32>
    %31 = tpu.matmul %28, %29, %cst {dimension_numbers = #tpu.dot_dimension_numbers<[1], [0], [0], [1], [0, 0, 1, 1], [], []>} : vector<128x128xf32>, vector<128x128xf32>, vector<128x128xf32> -> vector<128x128xf32>
    %32 = vector.broadcast %30 : vector<1x128xf32> to vector<128x128xf32>
    %33 = arith.addf %31, %32 : vector<128x128xf32>
    %34 = math.tanh %33 : vector<128x128xf32>
    %c0_9 = arith.constant 0 : index
    %c0_10 = arith.constant 0 : index
    %35 = vector.load %arg6[%c0_9, %c0_10] : memref<128x128xf32, #tpu.memory_space<vmem>>, vector<128x128xf32>
    %c0_11 = arith.constant 0 : index
    %c0_12 = arith.constant 0 : index
    %36 = vector.load %arg7[%c0_11, %c0_12] : memref<1x128xf32, #tpu.memory_space<vmem>>, vector<1x128xf32>
    %cst_13 = arith.constant dense<0.000000e+00> : vector<128x128xf32>
    %37 = tpu.matmul %34, %35, %cst_13 {dimension_numbers = #tpu.dot_dimension_numbers<[1], [0], [0], [1], [0, 0, 1, 1], [], []>} : vector<128x128xf32>, vector<128x128xf32>, vector<128x128xf32> -> vector<128x128xf32>
    %38 = vector.broadcast %36 : vector<1x128xf32> to vector<128x128xf32>
    %39 = arith.addf %37, %38 : vector<128x128xf32>
    %c0_14 = arith.constant 0 : index
    %c0_15 = arith.constant 0 : index
    %40 = vector.load %arg8[%c0_14, %c0_15] : memref<128x128xf32, #tpu.memory_space<vmem>>, vector<128x128xf32>
    tpu.vector_store %arg8[%c0_14, %c0_15], %39 {strides = array<i32>} : memref<128x128xf32, #tpu.memory_space<vmem>>, vector<128x128xf32>,
    return
  }
  func.func @transform_0(%arg0: i32) -> (i32, i32) {
    %c0_i32 = arith.constant 0 : i32
    %c0_i32_0 = arith.constant 0 : i32
    return %arg0, %c0_i32 : i32, i32
  }
  func.func @transform_1(%arg0: i32) -> (i32, i32) {
    %c0_i32 = arith.constant 0 : i32
    %c0_i32_0 = arith.constant 0 : i32
    %c0_i32_1 = arith.constant 0 : i32
    return %c0_i32, %c0_i32_0 : i32, i32
  }
  func.func @transform_2(%arg0: i32) -> (i32, i32) {
    %c0_i32 = arith.constant 0 : i32
    %c0_i32_0 = arith.constant 0 : i32
    %c0_i32_1 = arith.constant 0 : i32
    return %c0_i32, %c0_i32_0 : i32, i32
  }
  func.func @transform_3(%arg0: i32) -> (i32, i32) {
    %c0_i32 = arith.constant 0 : i32
    %c0_i32_0 = arith.constant 0 : i32
    %c0_i32_1 = arith.constant 0 : i32
    return %c0_i32, %c0_i32_0 : i32, i32
  }
  func.func @transform_4(%arg0: i32) -> (i32, i32) {
    %c0_i32 = arith.constant 0 : i32
    %c0_i32_0 = arith.constant 0 : i32
    %c0_i32_1 = arith.constant 0 : i32
    return %c0_i32, %c0_i32_0 : i32, i32
  }
  func.func @transform_5(%arg0: i32) -> (i32, i32) {
    %c0_i32 = arith.constant 0 : i32
    %c0_i32_0 = arith.constant 0 : i32
    %c0_i32_1 = arith.constant 0 : i32
    return %c0_i32, %c0_i32_0 : i32, i32
  }
  func.func @transform_6(%arg0: i32) -> (i32, i32) {
    %c0_i32 = arith.constant 0 : i32
    %c0_i32_0 = arith.constant 0 : i32
    %c0_i32_1 = arith.constant 0 : i32
    return %c0_i32, %c0_i32_0 : i32, i32
  }
  func.func @transform_7(%arg0: i32) -> (i32, i32) {
    %c0_i32 = arith.constant 0 : i32
    %c0_i32_0 = arith.constant 0 : i32
    return %arg0, %c0_i32 : i32, i32
  }
}

</mosaic_0001>

<llo_original>
// kernel: tpu_custom_call.1
$region0: #{tpu_custom_call.1}
  #allocation0 [shape = 'u32[]', space=smem, size = 0x4, offset = 0x4, fixed_abs, tag = 'smem constant byte address 0x4 - core index']
  #allocation1 [shape = 'u32[144,128]{1,0:T(1,128)}', space=vmem, size = 0x12000, scoped, tag = 'internal scratch']
  %s0 = inlined_call_operand.vmem [shape: f32[512,4], index: 0, kind: input, shape index: {}]
  %s1 = inlined_call_operand.vmem [shape: f32[4,128], index: 1, kind: input, shape index: {}]
  %s2 = inlined_call_operand.vmem [shape: f32[1,128], index: 2, kind: input, shape index: {}]
  %s3 = inlined_call_operand.vmem [shape: f32[128,128], index: 3, kind: input, shape index: {}]
  %s4 = inlined_call_operand.vmem [shape: f32[1,128], index: 4, kind: input, shape index: {}]
  %s5 = inlined_call_operand.vmem [shape: f32[128,128], index: 5, kind: input, shape index: {}]
  %s6 = inlined_call_operand.vmem [shape: f32[1,128], index: 6, kind: input, shape index: {}]
  %s7 = inlined_call_operand.hbm [shape: f32[512,128], index: 7, kind: output, shape index: {}]
  %s8 = sld [smem:[#allocation0]]
  $region61: #{tpu_custom_call.1} parent=0
    _
  %s10 = ssub.s32 1, %s8
  %s11 = scalar_select 0, %s10, %s8
  $region1: #{tpu_custom_call.1} parent=0
    #allocation2 [shape = 'u8[131072]{0}', space=vmem, size = 0x20000, scoped, tag = 'output window, operand 0']
    #allocation3 [shape = 's32[2]{0}', space=sflag, size = 0x8, scoped, tag = 'scoped memory for tpu_custom_call.1']
    %12 = vsyncpa [#allocation3], 0
    %s13 = scalar_lea.sflag [#allocation3], 1
    %14 = vsyncpa %s13, 0
    loop: start=0, step=1, limit=6
    $region2: #{tpu_custom_call.1} parent=1 // loop_pre_header
      _
    $region3: #{tpu_custom_call.1} parent=1 // loop_header
      %s16 = sphi 0, %s20
      %p17 = scmp.ge.s32.totalorder %s16, 6
      %s26 = sphi 0, %s28
      %s29 = sphi 0, %s26
      %s30 = sphi 0, %s29
      %s46 = sphi 0, %s30
      %s50 = sphi 0, %s50
      %s52 = sphi 0, %s50
      %s53 = sphi 0, %s52
      %s67 = sphi 0, %s53
      %s71 = sphi 0, %s71
      %s73 = sphi 0, %s71
      %s74 = sphi 0, %s73
      %s88 = sphi 0, %s74
      %s92 = sphi 0, %s92
      %s94 = sphi 0, %s92
      %s95 = sphi 0, %s94
      %s109 = sphi 0, %s95
      %s113 = sphi 0, %s113
      %s115 = sphi 0, %s113
      %s116 = sphi 0, %s115
      %s130 = sphi 0, %s116
      %s134 = sphi 0, %s134
      %s136 = sphi 0, %s134
      %s137 = sphi 0, %s136
      %s151 = sphi 0, %s137
      %s155 = sphi 0, %s155
      %s157 = sphi 0, %s155
      %s158 = sphi 0, %s157
      %s172 = sphi 0, %s158
      %s178 = sphi 0, %s180
      %s181 = sphi 0, %s178
      %s182 = sphi 0, %s181
      %s198 = sphi 0, %s182
    $region4: #{tpu_custom_call.1} parent=1 // loop_header_branch
      %19 = sbr.rel (%p17) target = $region8
    $region5: #{tpu_custom_call.1} parent=1 // loop_body
      %s21 = ssub.s32 %s16, 1
      %s22 = ssub.s32 %s16, 2
      %s23 = sadd.s32 %s16, 1
      %s24 = ssub.s32 %s16, %s23
      %p25 = scmp.eq.s32.totalorder %s24, 0
      %s27 = sadd.s32 %s26, 1
      %s28 = scalar_select %p25, %s26, %s27
      %p31 = pneg %p25
      %p32 = scmp.eq.s32.totalorder %s16, 3
      %p33 = por %p31, %p32
      %p34 = scmp.ne.s32.totalorder %s26, %s29
      %p35 = scmp.eq.s32.totalorder %s16, 0
      %p36 = por %p34, %p35
      %p37 = scmp.ne.s32.totalorder %s26, %s29
      %p38 = scmp.eq.s32.totalorder %s21, 3
      %p39 = por %p37, %p38
      %p40 = scmp.ne.s32.totalorder %s29, %s30
      %p41 = scmp.eq.s32.totalorder %s21, 0
      %p42 = por %p40, %p41
      %p43 = scmp.ne.s32.totalorder %s29, %s30
      %p44 = scmp.eq.s32.totalorder %s22, 3
      %p45 = por %p43, %p44
      %p47 = scmp.ne.s32.totalorder %s30, %s46
      %p48 = scmp.eq.s32.totalorder %s22, 0
      %p49 = por %p47, %p48
      %s51 = sadd.s32 %s50, 1
      %p54 = scmp.eq.s32.totalorder %s16, 3
      %p55 = scmp.ne.s32.totalorder %s50, %s52
      %p56 = scmp.eq.s32.totalorder %s16, 0
      %p57 = por %p55, %p56
      %p58 = scmp.ne.s32.totalorder %s50, %s52
      %p59 = scmp.eq.s32.totalorder %s21, 3
      %p60 = por %p58, %p59
      %p61 = scmp.ne.s32.totalorder %s52, %s53
      %p62 = scmp.eq.s32.totalorder %s21, 0
      %p63 = por %p61, %p62
      %p64 = scmp.ne.s32.totalorder %s52, %s53
      %p65 = scmp.eq.s32.totalorder %s22, 3
      %p66 = por %p64, %p65
      %p68 = scmp.ne.s32.totalorder %s53, %s67
      %p69 = scmp.eq.s32.totalorder %s22, 0
      %p70 = por %p68, %p69
      %s72 = sadd.s32 %s71, 1
      %p75 = scmp.eq.s32.totalorder %s16, 3
      %p76 = scmp.ne.s32.totalorder %s71, %s73
      %p77 = scmp.eq.s32.totalorder %s16, 0
      %p78 = por %p76, %p77
      %p79 = scmp.ne.s32.totalorder %s71, %s73
      %p80 = scmp.eq.s32.totalorder %s21, 3
      %p81 = por %p79, %p80
      %p82 = scmp.ne.s32.totalorder %s73, %s74
      %p83 = scmp.eq.s32.totalorder %s21, 0
      %p84 = por %p82, %p83
      %p85 = scmp.ne.s32.totalorder %s73, %s74
      %p86 = scmp.eq.s32.totalorder %s22, 3
      %p87 = por %p85, %p86
      %p89 = scmp.ne.s32.totalorder %s74, %s88
      %p90 = scmp.eq.s32.totalorder %s22, 0
      %p91 = por %p89, %p90
      %s93 = sadd.s32 %s92, 1
      %p96 = scmp.eq.s32.totalorder %s16, 3
      %p97 = scmp.ne.s32.totalorder %s92, %s94
      %p98 = scmp.eq.s32.totalorder %s16, 0
      %p99 = por %p97, %p98
      %p100 = scmp.ne.s32.totalorder %s92, %s94
      %p101 = scmp.eq.s32.totalorder %s21, 3
      %p102 = por %p100, %p101
      %p103 = scmp.ne.s32.totalorder %s94, %s95
      %p104 = scmp.eq.s32.totalorder %s21, 0
      %p105 = por %p103, %p104
      %p106 = scmp.ne.s32.totalorder %s94, %s95
      %p107 = scmp.eq.s32.totalorder %s22, 3
      %p108 = por %p106, %p107
      %p110 = scmp.ne.s32.totalorder %s95, %s109
      %p111 = scmp.eq.s32.totalorder %s22, 0
      %p112 = por %p110, %p111
      %s114 = sadd.s32 %s113, 1
      %p117 = scmp.eq.s32.totalorder %s16, 3
      %p118 = scmp.ne.s32.totalorder %s113, %s115
      %p119 = scmp.eq.s32.totalorder %s16, 0
      %p120 = por %p118, %p119
      %p121 = scmp.ne.s32.totalorder %s113, %s115
      %p122 = scmp.eq.s32.totalorder %s21, 3
      %p123 = por %p121, %p122
      %p124 = scmp.ne.s32.totalorder %s115, %s116
      %p125 = scmp.eq.s32.totalorder %s21, 0
      %p126 = por %p124, %p125
      %p127 = scmp.ne.s32.totalorder %s115, %s116
      %p128 = scmp.eq.s32.totalorder %s22, 3
      %p129 = por %p127, %p128
      %p131 = scmp.ne.s32.totalorder %s116, %s130
      %p132 = scmp.eq.s32.totalorder %s22, 0
      %p133 = por %p131, %p132
      %s135 = sadd.s32 %s134, 1
      %p138 = scmp.eq.s32.totalorder %s16, 3
      %p139 = scmp.ne.s32.totalorder %s134, %s136
      %p140 = scmp.eq.s32.totalorder %s16, 0
      %p141 = por %p139, %p140
      %p142 = scmp.ne.s32.totalorder %s134, %s136
      %p143 = scmp.eq.s32.totalorder %s21, 3
      %p144 = por %p142, %p143
      %p145 = scmp.ne.s32.totalorder %s136, %s137
      %p146 = scmp.eq.s32.totalorder %s21, 0
      %p147 = por %p145, %p146
      %p148 = scmp.ne.s32.totalorder %s136, %s137
      %p149 = scmp.eq.s32.totalorder %s22, 3
      %p150 = por %p148, %p149
      %p152 = scmp.ne.s32.totalorder %s137, %s151
      %p153 = scmp.eq.s32.totalorder %s22, 0
      %p154 = por %p152, %p153
      %s156 = sadd.s32 %s155, 1
      %p159 = scmp.eq.s32.totalorder %s16, 3
      %p160 = scmp.ne.s32.totalorder %s155, %s157
      %p161 = scmp.eq.s32.totalorder %s16, 0
      %p162 = por %p160, %p161
      %p163 = scmp.ne.s32.totalorder %s155, %s157
      %p164 = scmp.eq.s32.totalorder %s21, 3
      %p165 = por %p163, %p164
      %p166 = scmp.ne.s32.totalorder %s157, %s158
      %p167 = scmp.eq.s32.totalorder %s21, 0
      %p168 = por %p166, %p167
      %p169 = scmp.ne.s32.totalorder %s157, %s158
      %p170 = scmp.eq.s32.totalorder %s22, 3
      %p171 = por %p169, %p170
      %p173 = scmp.ne.s32.totalorder %s158, %s172
      %p174 = scmp.eq.s32.totalorder %s22, 0
      %p175 = por %p173, %p174
      %s176 = ssub.s32 %s16, %s23
      %p177 = scmp.eq.s32.totalorder %s176, 0
      %s179 = sadd.s32 %s178, 1
      %s180 = scalar_select %p177, %s178, %s179
      %p183 = pneg %p177
      %p184 = scmp.eq.s32.totalorder %s16, 3
      %p185 = por %p183, %p184
      %p186 = scmp.ne.s32.totalorder %s178, %s181
      %p187 = scmp.eq.s32.totalorder %s16, 0
      %p188 = por %p186, %p187
      %p189 = scmp.ne.s32.totalorder %s178, %s181
      %p190 = scmp.eq.s32.totalorder %s21, 3
      %p191 = por %p189, %p190
      %p192 = scmp.ne.s32.totalorder %s181, %s182
      %p193 = scmp.eq.s32.totalorder %s21, 0
      %p194 = por %p192, %p193
      %p195 = scmp.ne.s32.totalorder %s181, %s182
      %p196 = scmp.eq.s32.totalorder %s22, 3
      %p197 = por %p195, %p196
      %p199 = scmp.ne.s32.totalorder %s182, %s198
      %p200 = scmp.eq.s32.totalorder %s22, 0
      %p201 = por %p199, %p200
      %p202 = scmp.le.s32.totalorder 1, %s16
      %p203 = scmp.lt.s32.totalorder %s16, 5
      %p204 = pnand %p202, %p203
      %p205 = pneg %p204
      // Predicated region
      $region9: #{tpu_custom_call.1} parent=5 // pred_check
        _
      $region10: #{tpu_custom_call.1} parent=5 // pred_check_branch
        %207 = sbr.rel (%p204) target = $region12
      $region11: #{tpu_custom_call.1} parent=5 // pred_region
        %s208 = ssub.s32 %s16, 1
        // Predicated region
        $region13: #{tpu_custom_call.1} parent=11 // pred_check
          %p209 = pneg %p63
        $region14: #{tpu_custom_call.1} parent=11 // pred_check_branch
          %211 = sbr.rel (%p209) target = $region16
        $region15: #{tpu_custom_call.1} parent=11 // pred_region
          _
        $region16: #{tpu_custom_call.1} parent=11 // pred_fallthru
          _
        // Predicated region
        $region17: #{tpu_custom_call.1} parent=11 // pred_check
          %p212 = pneg %p84
        $region18: #{tpu_custom_call.1} parent=11 // pred_check_branch
          %214 = sbr.rel (%p212) target = $region20
        $region19: #{tpu_custom_call.1} parent=11 // pred_region
          _
        $region20: #{tpu_custom_call.1} parent=11 // pred_fallthru
          _
        // Predicated region
        $region21: #{tpu_custom_call.1} parent=11 // pred_check
          %p215 = pneg %p105
        $region22: #{tpu_custom_call.1} parent=11 // pred_check_branch
          %217 = sbr.rel (%p215) target = $region24
        $region23: #{tpu_custom_call.1} parent=11 // pred_region
          _
        $region24: #{tpu_custom_call.1} parent=11 // pred_fallthru
          _
        // Predicated region
        $region25: #{tpu_custom_call.1} parent=11 // pred_check
          %p218 = pneg %p126
        $region26: #{tpu_custom_call.1} parent=11 // pred_check_branch
          %220 = sbr.rel (%p218) target = $region28
        $region27: #{tpu_custom_call.1} parent=11 // pred_region
          _
        $region28: #{tpu_custom_call.1} parent=11 // pred_fallthru
          _
        // Predicated region
        $region29: #{tpu_custom_call.1} parent=11 // pred_check
          %p221 = pneg %p147
        $region30: #{tpu_custom_call.1} parent=11 // pred_check_branch
          %223 = sbr.rel (%p221) target = $region32
        $region31: #{tpu_custom_call.1} parent=11 // pred_region
          _
        $region32: #{tpu_custom_call.1} parent=11 // pred_fallthru
          _
        // Predicated region
        $region33: #{tpu_custom_call.1} parent=11 // pred_check
          %p224 = pneg %p168
        $region34: #{tpu_custom_call.1} parent=11 // pred_check_branch
          %226 = sbr.rel (%p224) target = $region36
        $region35: #{tpu_custom_call.1} parent=11 // pred_region
          _
        $region36: #{tpu_custom_call.1} parent=11 // pred_fallthru
          _
      $region12: #{tpu_custom_call.1} parent=5 // pred_fallthru
        _
      %p227 = scmp.lt.s32.totalorder %s16, 4
      // Predicated region
      $region37: #{tpu_custom_call.1} parent=5 // pred_check
        %p228 = pneg %p227
      $region38: #{tpu_custom_call.1} parent=5 // pred_check_branch
        %230 = sbr.rel (%p228) target = $region40
      $region39: #{tpu_custom_call.1} parent=5 // pred_region
        // Predicated region
        $region41: #{tpu_custom_call.1} parent=39 // pred_check
          %p231 = pneg %p36
        $region42: #{tpu_custom_call.1} parent=39 // pred_check_branch
          %233 = sbr.rel (%p231) target = $region44
        $region43: #{tpu_custom_call.1} parent=39 // pred_region
          %s234 = smul.u32 16, %s16
          %p235 = scmp.lt.s32.totalorder %s234, 63
          %s236 = scalar_select %p235, %s234, 63
          %s237 = smul.addr %s236, 8
          %s238 = scalar_lea.vmem %s0, %s237
          %s239 = smul.u32 16, %s16
        $region44: #{tpu_custom_call.1} parent=39 // pred_fallthru
          _
      $region40: #{tpu_custom_call.1} parent=5 // pred_fallthru
        _
      %p240 = scmp.le.s32.totalorder 1, %s16
      %p241 = scmp.lt.s32.totalorder %s16, 5
      %p242 = pnand %p240, %p241
      %p243 = pneg %p242
      // Predicated region
      $region45: #{tpu_custom_call.1} parent=5 // pred_check
        _
      $region46: #{tpu_custom_call.1} parent=5 // pred_check_branch
        %245 = sbr.rel (%p242) target = $region48
      $region47: #{tpu_custom_call.1} parent=5 // pred_region
        %s246 = ssub.s32 %s16, 1
        %s247 = smul.u32 16, %s21
        %p248 = scmp.lt.s32.totalorder %s247, 63
        %s249 = scalar_select %p248, %s247, 63
        %s250 = smul.addr %s249, 8
        %s251 = scalar_lea.vmem %s0, %s250
        %p252 = pneg %p42
        %p253 = pneg %p39
        %p254 = pneg %p63
        %p255 = pneg %p60
        %p256 = pneg %p84
        %p257 = pneg %p81
        %p258 = pneg %p105
        %p259 = pneg %p102
        %p260 = pneg %p126
        %p261 = pneg %p123
        %p262 = pneg %p147
        %p263 = pneg %p144
        %p264 = pneg %p168
        %p265 = pneg %p165
        %p266 = pneg %p194
        %p267 = pneg %p191
        %s268 = sand.u32 %s181, 1
        %s269 = scalar_lea.sflag [#allocation3], %s268
        %s270 = sand.u32 %s181, 1
        %s271 = smul.addr %s270, 128
        %s272 = scalar_lea.vmem [#allocation2], %s271
        %s273 = smul.u32 16, %s21
        %p274 = scmp.lt.s32.totalorder %s273, 63
        %s275 = scalar_select %p274, %s273, 63
        %s276 = smul.addr %s275, 8
        %s277 = scalar_lea.vmem %s0, %s276
        %s278 = smul.u32 16, %s21
        %s279 = smul.u32 16, %s21
        %v280 = vld [vmem:[%s277] sm:$0xff]
        %v281 = vld [vmem:[%s277 + $0x8] sm:$0xff]
        %v282 = vld [vmem:[%s277 + $0x10] sm:$0xff]
        %v283 = vld [vmem:[%s277 + $0x18] sm:$0xff]
        %v284 = vld [vmem:[%s277 + $0x20] sm:$0xff]
        %v285 = vld [vmem:[%s277 + $0x28] sm:$0xff]
        %v286 = vld [vmem:[%s277 + $0x30] sm:$0xff]
        %v287 = vld [vmem:[%s277 + $0x38] sm:$0xff]
        %v288 = vld [vmem:[%s277 + $0x40] sm:$0xff]
        %v289 = vld [vmem:[%s277 + $0x48] sm:$0xff]
        %v290 = vld [vmem:[%s277 + $0x50] sm:$0xff]
        %v291 = vld [vmem:[%s277 + $0x58] sm:$0xff]
        %v292 = vld [vmem:[%s277 + $0x60] sm:$0xff]
        %v293 = vld [vmem:[%s277 + $0x68] sm:$0xff]
        %v294 = vld [vmem:[%s277 + $0x70] sm:$0xff]
        %v295 = vld [vmem:[%s277 + $0x78] sm:$0xff]
        %v296 = vld [vmem:[%s1] sm:$0xf]
        %v297 = vld [vmem:[%s2] sm:$0x1]
        %299 = vset.pattern.permute.xlu0 0
        %300 = vperm.xlu0 %299, %v280
        %v301 = vpop.permute.xlu0 %300
        %304 = vset.pattern.permute.xlu0 0
        %305 = vperm.xlu0 %304, %v281
        %v306 = vpop.permute.xlu0 %305
        %309 = vset.pattern.permute.xlu0 0
        %310 = vperm.xlu0 %309, %v282
        %v311 = vpop.permute.xlu0 %310
        %314 = vset.pattern.permute.xlu0 0
        %315 = vperm.xlu0 %314, %v283
        %v316 = vpop.permute.xlu0 %315
        %319 = vset.pattern.permute.xlu0 0
        %320 = vperm.xlu0 %319, %v284
        %v321 = vpop.permute.xlu0 %320
        %324 = vset.pattern.permute.xlu0 0
        %325 = vperm.xlu0 %324, %v285
        %v326 = vpop.permute.xlu0 %325
        %329 = vset.pattern.permute.xlu0 0
        %330 = vperm.xlu0 %329, %v286
        %v331 = vpop.permute.xlu0 %330
        %334 = vset.pattern.permute.xlu0 0
        %335 = vperm.xlu0 %334, %v287
        %v336 = vpop.permute.xlu0 %335
        %339 = vset.pattern.permute.xlu0 0
        %340 = vperm.xlu0 %339, %v288
        %v341 = vpop.permute.xlu0 %340
        %344 = vset.pattern.permute.xlu0 0
        %345 = vperm.xlu0 %344, %v289
        %v346 = vpop.permute.xlu0 %345
        %349 = vset.pattern.permute.xlu0 0
        %350 = vperm.xlu0 %349, %v290
        %v351 = vpop.permute.xlu0 %350
        %354 = vset.pattern.permute.xlu0 0
        %355 = vperm.xlu0 %354, %v291
        %v356 = vpop.permute.xlu0 %355
        %359 = vset.pattern.permute.xlu0 0
        %360 = vperm.xlu0 %359, %v292
        %v361 = vpop.permute.xlu0 %360
        %364 = vset.pattern.permute.xlu0 0
        %365 = vperm.xlu0 %364, %v293
        %v366 = vpop.permute.xlu0 %365
        %369 = vset.pattern.permute.xlu0 0
        %370 = vperm.xlu0 %369, %v294
        %v371 = vpop.permute.xlu0 %370
        %374 = vset.pattern.permute.xlu0 0
        %375 = vperm.xlu0 %374, %v295
        %v376 = vpop.permute.xlu0 %375
        %v378 = vlaneseq
        %v379 = vshrl.u32 %v378, 7
        %v380 = vsub.s32 0, %v379
        %v381 = vrot.slane %v296, %v380
        %v382 = vmul.f32 %v301, %v381
        %v383 = vmul.f32 %v306, %v381
        %v384 = vmul.f32 %v311, %v381
        %v385 = vmul.f32 %v316, %v381
        %v386 = vmul.f32 %v321, %v381
        %v387 = vmul.f32 %v326, %v381
        %v388 = vmul.f32 %v331, %v381
        %v389 = vmul.f32 %v336, %v381
        %v390 = vmul.f32 %v341, %v381
        %v391 = vmul.f32 %v346, %v381
        %v392 = vmul.f32 %v351, %v381
        %v393 = vmul.f32 %v356, %v381
        %v394 = vmul.f32 %v361, %v381
        %v395 = vmul.f32 %v366, %v381
        %v396 = vmul.f32 %v371, %v381
        %v397 = vmul.f32 %v376, %v381
        %v399 = vlaneseq
        %v400 = vshrl.u32 %v399, 7
        %v401 = vsub.s32 0, %v400
        %v402 = vrot.slane %v297, %v401
        %v404 = vadd.f32 %v402, %v382
        %v405 = vadd.f32 %v402, %v383
        %v406 = vadd.f32 %v402, %v384
        %v407 = vadd.f32 %v402, %v385
        %v408 = vadd.f32 %v402, %v386
        %v409 = vadd.f32 %v402, %v387
        %v410 = vadd.f32 %v402, %v388
        %v411 = vadd.f32 %v402, %v389
        %v412 = vadd.f32 %v402, %v390
        %v413 = vadd.f32 %v402, %v391
        %v414 = vadd.f32 %v402, %v392
        %v415 = vadd.f32 %v402, %v393
        %v416 = vadd.f32 %v402, %v394
        %v417 = vadd.f32 %v402, %v395
        %v418 = vadd.f32 %v402, %v396
        %v419 = vadd.f32 %v402, %v397
        %420 = vset.pattern.permute.xlu0 1
        %421 = vperm.xlu0 %420, %v280
        %v422 = vpop.permute.xlu0 %421
        %424 = vset.pattern.permute.xlu0 1
        %425 = vperm.xlu0 %424, %v281
        %v426 = vpop.permute.xlu0 %425
        %428 = vset.pattern.permute.xlu0 1
        %429 = vperm.xlu0 %428, %v282
        %v430 = vpop.permute.xlu0 %429
        %432 = vset.pattern.permute.xlu0 1
        %433 = vperm.xlu0 %432, %v283
        %v434 = vpop.permute.xlu0 %433
        %436 = vset.pattern.permute.xlu0 1
        %437 = vperm.xlu0 %436, %v284
        %v438 = vpop.permute.xlu0 %437
        %440 = vset.pattern.permute.xlu0 1
        %441 = vperm.xlu0 %440, %v285
        %v442 = vpop.permute.xlu0 %441
        %444 = vset.pattern.permute.xlu0 1
        %445 = vperm.xlu0 %444, %v286
        %v446 = vpop.permute.xlu0 %445
        %448 = vset.pattern.permute.xlu0 1
        %449 = vperm.xlu0 %448, %v287
        %v450 = vpop.permute.xlu0 %449
        %452 = vset.pattern.permute.xlu0 1
        %453 = vperm.xlu0 %452, %v288
        %v454 = vpop.permute.xlu0 %453
        %456 = vset.pattern.permute.xlu0 1
        %457 = vperm.xlu0 %456, %v289
        %v458 = vpop.permute.xlu0 %457
        %460 = vset.pattern.permute.xlu0 1
        %461 = vperm.xlu0 %460, %v290
        %v462 = vpop.permute.xlu0 %461
        %464 = vset.pattern.permute.xlu0 1
        %465 = vperm.xlu0 %464, %v291
        %v466 = vpop.permute.xlu0 %465
        %468 = vset.pattern.permute.xlu0 1
        %469 = vperm.xlu0 %468, %v292
        %v470 = vpop.permute.xlu0 %469
        %472 = vset.pattern.permute.xlu0 1
        %473 = vperm.xlu0 %472, %v293
        %v474 = vpop.permute.xlu0 %473
        %476 = vset.pattern.permute.xlu0 1
        %477 = vperm.xlu0 %476, %v294
        %v478 = vpop.permute.xlu0 %477
        %480 = vset.pattern.permute.xlu0 1
        %481 = vperm.xlu0 %480, %v295
        %v482 = vpop.permute.xlu0 %481
        %v484 = vlaneseq
        %v485 = vshrl.u32 %v484, 7
        %v486 = vsub.s32 1, %v485
        %v487 = vrot.slane %v296, %v486
        %v488 = vmul.f32 %v422, %v487
        %v489 = vmul.f32 %v426, %v487
        %v490 = vmul.f32 %v430, %v487
        %v491 = vmul.f32 %v434, %v487
        %v492 = vmul.f32 %v438, %v487
        %v493 = vmul.f32 %v442, %v487
        %v494 = vmul.f32 %v446, %v487
        %v495 = vmul.f32 %v450, %v487
        %v496 = vmul.f32 %v454, %v487
        %v497 = vmul.f32 %v458, %v487
        %v498 = vmul.f32 %v462, %v487
        %v499 = vmul.f32 %v466, %v487
        %v500 = vmul.f32 %v470, %v487
        %v501 = vmul.f32 %v474, %v487
        %v502 = vmul.f32 %v478, %v487
        %v503 = vmul.f32 %v482, %v487
        %v504 = vadd.f32 %v404, %v488
        %v505 = vadd.f32 %v405, %v489
        %v506 = vadd.f32 %v406, %v490
        %v507 = vadd.f32 %v407, %v491
        %v508 = vadd.f32 %v408, %v492
        %v509 = vadd.f32 %v409, %v493
        %v510 = vadd.f32 %v410, %v494
        %v511 = vadd.f32 %v411, %v495
        %v512 = vadd.f32 %v412, %v496
        %v513 = vadd.f32 %v413, %v497
        %v514 = vadd.f32 %v414, %v498
        %v515 = vadd.f32 %v415, %v499
        %v516 = vadd.f32 %v416, %v500
        %v517 = vadd.f32 %v417, %v501
        %v518 = vadd.f32 %v418, %v502
        %v519 = vadd.f32 %v419, %v503
        %520 = vset.pattern.permute.xlu0 2
        %521 = vperm.xlu0 %520, %v280
        %v522 = vpop.permute.xlu0 %521
        %524 = vset.pattern.permute.xlu0 2
        %525 = vperm.xlu0 %524, %v281
        %v526 = vpop.permute.xlu0 %525
        %528 = vset.pattern.permute.xlu0 2
        %529 = vperm.xlu0 %528, %v282
        %v530 = vpop.permute.xlu0 %529
        %532 = vset.pattern.permute.xlu0 2
        %533 = vperm.xlu0 %532, %v283
        %v534 = vpop.permute.xlu0 %533
        %536 = vset.pattern.permute.xlu0 2
        %537 = vperm.xlu0 %536, %v284
        %v538 = vpop.permute.xlu0 %537
        %540 = vset.pattern.permute.xlu0 2
        %541 = vperm.xlu0 %540, %v285
        %v542 = vpop.permute.xlu0 %541
        %544 = vset.pattern.permute.xlu0 2
        %545 = vperm.xlu0 %544, %v286
        %v546 = vpop.permute.xlu0 %545
        %548 = vset.pattern.permute.xlu0 2
        %549 = vperm.xlu0 %548, %v287
        %v550 = vpop.permute.xlu0 %549
        %552 = vset.pattern.permute.xlu0 2
        %553 = vperm.xlu0 %552, %v288
        %v554 = vpop.permute.xlu0 %553
        %556 = vset.pattern.permute.xlu0 2
        %557 = vperm.xlu0 %556, %v289
        %v558 = vpop.permute.xlu0 %557
        %560 = vset.pattern.permute.xlu0 2
        %561 = vperm.xlu0 %560, %v290
        %v562 = vpop.permute.xlu0 %561
        %564 = vset.pattern.permute.xlu0 2
        %565 = vperm.xlu0 %564, %v291
        %v566 = vpop.permute.xlu0 %565
        %568 = vset.pattern.permute.xlu0 2
        %569 = vperm.xlu0 %568, %v292
        %v570 = vpop.permute.xlu0 %569
        %572 = vset.pattern.permute.xlu0 2
        %573 = vperm.xlu0 %572, %v293
        %v574 = vpop.permute.xlu0 %573
        %576 = vset.pattern.permute.xlu0 2
        %577 = vperm.xlu0 %576, %v294
        %v578 = vpop.permute.xlu0 %577
        %580 = vset.pattern.permute.xlu0 2
        %581 = vperm.xlu0 %580, %v295
        %v582 = vpop.permute.xlu0 %581
        %v584 = vlaneseq
        %v585 = vshrl.u32 %v584, 7
        %v586 = vsub.s32 2, %v585
        %v587 = vrot.slane %v296, %v586
        %v588 = vmul.f32 %v522, %v587
        %v589 = vmul.f32 %v526, %v587
        %v590 = vmul.f32 %v530, %v587
        %v591 = vmul.f32 %v534, %v587
        %v592 = vmul.f32 %v538, %v587
        %v593 = vmul.f32 %v542, %v587
        %v594 = vmul.f32 %v546, %v587
        %v595 = vmul.f32 %v550, %v587
        %v596 = vmul.f32 %v554, %v587
        %v597 = vmul.f32 %v558, %v587
        %v598 = vmul.f32 %v562, %v587
        %v599 = vmul.f32 %v566, %v587
        %v600 = vmul.f32 %v570, %v587
        %v601 = vmul.f32 %v574, %v587
        %v602 = vmul.f32 %v578, %v587
        %v603 = vmul.f32 %v582, %v587
        %v604 = vadd.f32 %v504, %v588
        %v605 = vadd.f32 %v505, %v589
        %v606 = vadd.f32 %v506, %v590
        %v607 = vadd.f32 %v507, %v591
        %v608 = vadd.f32 %v508, %v592
        %v609 = vadd.f32 %v509, %v593
        %v610 = vadd.f32 %v510, %v594
        %v611 = vadd.f32 %v511, %v595
        %v612 = vadd.f32 %v512, %v596
        %v613 = vadd.f32 %v513, %v597
        %v614 = vadd.f32 %v514, %v598
        %v615 = vadd.f32 %v515, %v599
        %v616 = vadd.f32 %v516, %v600
        %v617 = vadd.f32 %v517, %v601
        %v618 = vadd.f32 %v518, %v602
        %v619 = vadd.f32 %v519, %v603
        %620 = vset.pattern.permute.xlu0 3
        %621 = vperm.xlu0 %620, %v280
        %v622 = vpop.permute.xlu0 %621
        %624 = vset.pattern.permute.xlu0 3
        %625 = vperm.xlu0 %624, %v281
        %v626 = vpop.permute.xlu0 %625
        %628 = vset.pattern.permute.xlu0 3
        %629 = vperm.xlu0 %628, %v282
        %v630 = vpop.permute.xlu0 %629
        %632 = vset.pattern.permute.xlu0 3
        %633 = vperm.xlu0 %632, %v283
        %v634 = vpop.permute.xlu0 %633
        %636 = vset.pattern.permute.xlu0 3
        %637 = vperm.xlu0 %636, %v284
        %v638 = vpop.permute.xlu0 %637
        %640 = vset.pattern.permute.xlu0 3
        %641 = vperm.xlu0 %640, %v285
        %v642 = vpop.permute.xlu0 %641
        %644 = vset.pattern.permute.xlu0 3
        %645 = vperm.xlu0 %644, %v286
        %v646 = vpop.permute.xlu0 %645
        %648 = vset.pattern.permute.xlu0 3
        %649 = vperm.xlu0 %648, %v287
        %v650 = vpop.permute.xlu0 %649
        %652 = vset.pattern.permute.xlu0 3
        %653 = vperm.xlu0 %652, %v288
        %v654 = vpop.permute.xlu0 %653
        %656 = vset.pattern.permute.xlu0 3
        %657 = vperm.xlu0 %656, %v289
        %v658 = vpop.permute.xlu0 %657
        %660 = vset.pattern.permute.xlu0 3
        %661 = vperm.xlu0 %660, %v290
        %v662 = vpop.permute.xlu0 %661
        %664 = vset.pattern.permute.xlu0 3
        %665 = vperm.xlu0 %664, %v291
        %v666 = vpop.permute.xlu0 %665
        %668 = vset.pattern.permute.xlu0 3
        %669 = vperm.xlu0 %668, %v292
        %v670 = vpop.permute.xlu0 %669
        %672 = vset.pattern.permute.xlu0 3
        %673 = vperm.xlu0 %672, %v293
        %v674 = vpop.permute.xlu0 %673
        %676 = vset.pattern.permute.xlu0 3
        %677 = vperm.xlu0 %676, %v294
        %v678 = vpop.permute.xlu0 %677
        %680 = vset.pattern.permute.xlu0 3
        %681 = vperm.xlu0 %680, %v295
        %v682 = vpop.permute.xlu0 %681
        %v684 = vlaneseq
        %v685 = vshrl.u32 %v684, 7
        %v686 = vsub.s32 3, %v685
        %v687 = vrot.slane %v296, %v686
        %v688 = vmul.f32 %v622, %v687
        %v689 = vmul.f32 %v626, %v687
        %v690 = vmul.f32 %v630, %v687
        %v691 = vmul.f32 %v634, %v687
        %v692 = vmul.f32 %v638, %v687
        %v693 = vmul.f32 %v642, %v687
        %v694 = vmul.f32 %v646, %v687
        %v695 = vmul.f32 %v650, %v687
        %v696 = vmul.f32 %v654, %v687
        %v697 = vmul.f32 %v658, %v687
        %v698 = vmul.f32 %v662, %v687
        %v699 = vmul.f32 %v666, %v687
        %v700 = vmul.f32 %v670, %v687
        %v701 = vmul.f32 %v674, %v687
        %v702 = vmul.f32 %v678, %v687
        %v703 = vmul.f32 %v682, %v687
        %v704 = vadd.f32 %v604, %v688
        %v705 = vadd.f32 %v605, %v689
        %v706 = vadd.f32 %v606, %v690
        %v707 = vadd.f32 %v607, %v691
        %v708 = vadd.f32 %v608, %v692
        %v709 = vadd.f32 %v609, %v693
        %v710 = vadd.f32 %v610, %v694
        %v711 = vadd.f32 %v611, %v695
        %v712 = vadd.f32 %v612, %v696
        %v713 = vadd.f32 %v613, %v697
        %v714 = vadd.f32 %v614, %v698
        %v715 = vadd.f32 %v615, %v699
        %v716 = vadd.f32 %v616, %v700
        %v717 = vadd.f32 %v617, %v701
        %v718 = vadd.f32 %v618, %v702
        %v719 = vadd.f32 %v619, %v703
        %v720 = vtanh.pop %v704
        %v721 = vtanh.pop %v705
        %v722 = vtanh.pop %v706
        %v723 = vtanh.pop %v707
        %v724 = vtanh.pop %v708
        %v725 = vtanh.pop %v709
        %v726 = vtanh.pop %v710
        %v727 = vtanh.pop %v711
        %v728 = vtanh.pop %v712
        %v729 = vtanh.pop %v713
        %v730 = vtanh.pop %v714
        %v731 = vtanh.pop %v715
        %v732 = vtanh.pop %v716
        %v733 = vtanh.pop %v717
        %v734 = vtanh.pop %v718
        %v735 = vtanh.pop %v719
        %v736 = vld [vmem:[%s3] sm:$0xff]
        %v737 = vld [vmem:[%s3 + $0x8] sm:$0xff]
        %v738 = vld [vmem:[%s3 + $0x10] sm:$0xff]
        %v739 = vld [vmem:[%s3 + $0x18] sm:$0xff]
        %v740 = vld [vmem:[%s3 + $0x20] sm:$0xff]
        %v741 = vld [vmem:[%s3 + $0x28] sm:$0xff]
        %v742 = vld [vmem:[%s3 + $0x30] sm:$0xff]
        %v743 = vld [vmem:[%s3 + $0x38] sm:$0xff]
        %v744 = vld [vmem:[%s3 + $0x40] sm:$0xff]
        %v745 = vld [vmem:[%s3 + $0x48] sm:$0xff]
        %v746 = vld [vmem:[%s3 + $0x50] sm:$0xff]
        %v747 = vld [vmem:[%s3 + $0x58] sm:$0xff]
        %v748 = vld [vmem:[%s3 + $0x60] sm:$0xff]
        %v749 = vld [vmem:[%s3 + $0x68] sm:$0xff]
        %v750 = vld [vmem:[%s3 + $0x70] sm:$0xff]
        %v751 = vld [vmem:[%s3 + $0x78] sm:$0xff]
        %v752 = vld [vmem:[%s4] sm:$0x1]
        %v754 = vlaneseq
        %v755 = vshrl.u32 %v754, 7
        %v756 = vsub.s32 0, %v755
        %v757 = vrot.slane %v752, %v756
        %759 = vmatprep.subr.mxu0 0.0
        %760 = vmatpush1.msra.mxu0 %v751
        %761 = vmatprep.subr.mxu0 0.0
        %762 = vmatpush1.msra.mxu0 %v750
        %763 = vmatprep.subr.mxu0 0.0
        %764 = vmatpush1.msra.mxu0 %v749
        %765 = vmatprep.subr.mxu0 0.0
        %766 = vmatpush1.msra.mxu0 %v748
        %767 = vmatprep.subr.mxu0 0.0
        %768 = vmatpush1.msra.mxu0 %v747
        %769 = vmatprep.subr.mxu0 0.0
        %770 = vmatpush1.msra.mxu0 %v746
        %771 = vmatprep.subr.mxu0 0.0
        %772 = vmatpush1.msra.mxu0 %v745
        %773 = vmatprep.subr.mxu0 0.0
        %774 = vmatpush1.msra.mxu0 %v744
        %775 = vmatprep.subr.mxu0 0.0
        %776 = vmatpush1.msra.mxu0 %v743
        %777 = vmatprep.subr.mxu0 0.0
        %778 = vmatpush1.msra.mxu0 %v742
        %779 = vmatprep.subr.mxu0 0.0
        %780 = vmatpush1.msra.mxu0 %v741
        %781 = vmatprep.subr.mxu0 0.0
        %782 = vmatpush1.msra.mxu0 %v740
        %783 = vmatprep.subr.mxu0 0.0
        %784 = vmatpush1.msra.mxu0 %v739
        %785 = vmatprep.subr.mxu0 0.0
        %786 = vmatpush1.msra.mxu0 %v738
        %787 = vmatprep.subr.mxu0 0.0
        %788 = vmatpush1.msra.mxu0 %v737
        %789 = vmatprep.subr.mxu0 0.0
        %790 = vmatpush1.msra.mxu0 %v736
        %791 = vmatprep.subr.mxu0 0.0
        %792 = vmatpush2.msra.mxu0 0.0
        %793 = vmatprep.subr.mxu0 0.0
        %794 = vmatpush2.msra.mxu0 0.0
        %795 = vmatprep.subr.mxu0 0.0
        %796 = vmatpush2.msra.mxu0 0.0
        %797 = vmatprep.subr.mxu0 0.0
        %798 = vmatpush2.msra.mxu0 0.0
        %799 = vmatprep.subr.mxu0 0.0
        %800 = vmatpush2.msra.mxu0 0.0
        %801 = vmatprep.subr.mxu0 0.0
        %802 = vmatpush2.msra.mxu0 0.0
        %803 = vmatprep.subr.mxu0 0.0
        %804 = vmatpush2.msra.mxu0 0.0
        %805 = vmatprep.subr.mxu0 0.0
        %806 = vmatpush2.msra.mxu0 0.0
        %807 = vmatprep.subr.mxu0 0.0
        %808 = vmatpush2.msra.mxu0 0.0
        %809 = vmatprep.subr.mxu0 0.0
        %810 = vmatpush2.msra.mxu0 0.0
        %811 = vmatprep.subr.mxu0 0.0
        %812 = vmatpush2.msra.mxu0 0.0
        %813 = vmatprep.subr.mxu0 0.0
        %814 = vmatpush2.msra.mxu0 0.0
        %815 = vmatprep.subr.mxu0 0.0
        %816 = vmatpush2.msra.mxu0 0.0
        %817 = vmatprep.subr.mxu0 0.0
        %818 = vmatpush2.msra.mxu0 0.0
        %819 = vmatprep.subr.mxu0 0.0
        %820 = vmatpush2.msra.mxu0 0.0
        %821 = vmatprep.subr.mxu0 0.0
        %822 = vmatpush2.msra.mxu0 0.0
        %823 = vmatprep.mubr.f32.mxu0 0.0
        %824 = vmatmul.mubr.f32.gmra.mxu0 %v720
        %v825 = vpop.f32.mrf.mxu0
        %v826 = vadd.f32 %v757, %v825
        %v827 = vpop.f32.mrf.mxu0
        %828 = vmatprep.mubr.f32.mxu0 0.0
        %829 = vmatmul.mubr.f32.gmra.mxu0 %v721
        %v830 = vpop.f32.mrf.mxu0
        %v831 = vadd.f32 %v757, %v830
        %v832 = vpop.f32.mrf.mxu0
        %833 = vmatprep.mubr.f32.mxu0 0.0
        %834 = vmatmul.mubr.f32.gmra.mxu0 %v722
        %v835 = vpop.f32.mrf.mxu0
        %v836 = vadd.f32 %v757, %v835
        %v837 = vpop.f32.mrf.mxu0
        %838 = vmatprep.mubr.f32.mxu0 0.0
        %839 = vmatmul.mubr.f32.gmra.mxu0 %v723
        %v840 = vpop.f32.mrf.mxu0
        %v841 = vadd.f32 %v757, %v840
        %v842 = vpop.f32.mrf.mxu0
        %843 = vmatprep.mubr.f32.mxu0 0.0
        %844 = vmatmul.mubr.f32.gmra.mxu0 %v724
        %v845 = vpop.f32.mrf.mxu0
        %v846 = vadd.f32 %v757, %v845
        %v847 = vpop.f32.mrf.mxu0
        %848 = vmatprep.mubr.f32.mxu0 0.0
        %849 = vmatmul.mubr.f32.gmra.mxu0 %v725
        %v850 = vpop.f32.mrf.mxu0
        %v851 = vadd.f32 %v757, %v850
        %v852 = vpop.f32.mrf.mxu0
        %853 = vmatprep.mubr.f32.mxu0 0.0
        %854 = vmatmul.mubr.f32.gmra.mxu0 %v726
        %v855 = vpop.f32.mrf.mxu0
        %v856 = vadd.f32 %v757, %v855
        %v857 = vpop.f32.mrf.mxu0
        %858 = vmatprep.mubr.f32.mxu0 0.0
        %859 = vmatmul.mubr.f32.gmra.mxu0 %v727
        %v860 = vpop.f32.mrf.mxu0
        %v861 = vadd.f32 %v757, %v860
        %v862 = vpop.f32.mrf.mxu0
        %863 = vmatprep.mubr.f32.mxu0 0.0
        %864 = vmatmul.mubr.f32.gmra.mxu0 %v728
        %v865 = vpop.f32.mrf.mxu0
        %v866 = vadd.f32 %v757, %v865
        %v867 = vpop.f32.mrf.mxu0
        %868 = vmatprep.mubr.f32.mxu0 0.0
        %869 = vmatmul.mubr.f32.gmra.mxu0 %v729
        %v870 = vpop.f32.mrf.mxu0
        %v871 = vadd.f32 %v757, %v870
        %v872 = vpop.f32.mrf.mxu0
        %873 = vmatprep.mubr.f32.mxu0 0.0
        %874 = vmatmul.mubr.f32.gmra.mxu0 %v730
        %v875 = vpop.f32.mrf.mxu0
        %v876 = vadd.f32 %v757, %v875
        %v877 = vpop.f32.mrf.mxu0
        %878 = vmatprep.mubr.f32.mxu0 0.0
        %879 = vmatmul.mubr.f32.gmra.mxu0 %v731
        %v880 = vpop.f32.mrf.mxu0
        %v881 = vadd.f32 %v757, %v880
        %v882 = vpop.f32.mrf.mxu0
        %883 = vmatprep.mubr.f32.mxu0 0.0
        %884 = vmatmul.mubr.f32.gmra.mxu0 %v732
        %v885 = vpop.f32.mrf.mxu0
        %v886 = vadd.f32 %v757, %v885
        %v887 = vpop.f32.mrf.mxu0
        %888 = vmatprep.mubr.f32.mxu0 0.0
        %889 = vmatmul.mubr.f32.gmra.mxu0 %v733
        %v890 = vpop.f32.mrf.mxu0
        %v891 = vadd.f32 %v757, %v890
        %v892 = vpop.f32.mrf.mxu0
        %893 = vmatprep.mubr.f32.mxu0 0.0
        %894 = vmatmul.mubr.f32.gmra.mxu0 %v734
        %v895 = vpop.f32.mrf.mxu0
        %v896 = vadd.f32 %v757, %v895
        %v897 = vpop.f32.mrf.mxu0
        %898 = vmatprep.mubr.f32.mxu0 0.0
        %899 = vmatmul.mubr.f32.gmra.mxu0 %v735
        %v900 = vpop.f32.mrf.mxu0
        %v901 = vadd.f32 %v757, %v900
        %v902 = vpop.f32.mrf.mxu0
        %903 = vdwg.mxu0
        %v904 = vtanh.pop %v826
        %v905 = vtanh.pop %v831
        %v906 = vtanh.pop %v836
        %v907 = vtanh.pop %v841
        %v908 = vtanh.pop %v846
        %v909 = vtanh.pop %v851
        %v910 = vtanh.pop %v856
        %v911 = vtanh.pop %v861
        %v912 = vtanh.pop %v866
        %v913 = vtanh.pop %v871
        %v914 = vtanh.pop %v876
        %v915 = vtanh.pop %v881
        %v916 = vtanh.pop %v886
        %v917 = vtanh.pop %v891
        %v918 = vtanh.pop %v896
        %v919 = vtanh.pop %v901
        %v920 = vld [vmem:[%s5] sm:$0xff]
        %v921 = vld [vmem:[%s5 + $0x8] sm:$0xff]
        %v922 = vld [vmem:[%s5 + $0x10] sm:$0xff]
        %v923 = vld [vmem:[%s5 + $0x18] sm:$0xff]
        %v924 = vld [vmem:[%s5 + $0x20] sm:$0xff]
        %v925 = vld [vmem:[%s5 + $0x28] sm:$0xff]
        %v926 = vld [vmem:[%s5 + $0x30] sm:$0xff]
        %v927 = vld [vmem:[%s5 + $0x38] sm:$0xff]
        %v928 = vld [vmem:[%s5 + $0x40] sm:$0xff]
        %v929 = vld [vmem:[%s5 + $0x48] sm:$0xff]
        %v930 = vld [vmem:[%s5 + $0x50] sm:$0xff]
        %v931 = vld [vmem:[%s5 + $0x58] sm:$0xff]
        %v932 = vld [vmem:[%s5 + $0x60] sm:$0xff]
        %v933 = vld [vmem:[%s5 + $0x68] sm:$0xff]
        %v934 = vld [vmem:[%s5 + $0x70] sm:$0xff]
        %v935 = vld [vmem:[%s5 + $0x78] sm:$0xff]
        %v936 = vld [vmem:[%s6] sm:$0x1]
        %v938 = vlaneseq
        %v939 = vshrl.u32 %v938, 7
        %v940 = vsub.s32 0, %v939
        %v941 = vrot.slane %v936, %v940
        %943 = vmatprep.subr.mxu0 0.0
        %944 = vmatpush1.msra.mxu0 %v935
        %945 = vmatprep.subr.mxu0 0.0
        %946 = vmatpush1.msra.mxu0 %v934
        %947 = vmatprep.subr.mxu0 0.0
        %948 = vmatpush1.msra.mxu0 %v933
        %949 = vmatprep.subr.mxu0 0.0
        %950 = vmatpush1.msra.mxu0 %v932
        %951 = vmatprep.subr.mxu0 0.0
        %952 = vmatpush1.msra.mxu0 %v931
        %953 = vmatprep.subr.mxu0 0.0
        %954 = vmatpush1.msra.mxu0 %v930
        %955 = vmatprep.subr.mxu0 0.0
        %956 = vmatpush1.msra.mxu0 %v929
        %957 = vmatprep.subr.mxu0 0.0
        %958 = vmatpush1.msra.mxu0 %v928
        %959 = vmatprep.subr.mxu0 0.0
        %960 = vmatpush1.msra.mxu0 %v927
        %961 = vmatprep.subr.mxu0 0.0
        %962 = vmatpush1.msra.mxu0 %v926
        %963 = vmatprep.subr.mxu0 0.0
        %964 = vmatpush1.msra.mxu0 %v925
        %965 = vmatprep.subr.mxu0 0.0
        %966 = vmatpush1.msra.mxu0 %v924
        %967 = vmatprep.subr.mxu0 0.0
        %968 = vmatpush1.msra.mxu0 %v923
        %969 = vmatprep.subr.mxu0 0.0
        %970 = vmatpush1.msra.mxu0 %v922
        %971 = vmatprep.subr.mxu0 0.0
        %972 = vmatpush1.msra.mxu0 %v921
        %973 = vmatprep.subr.mxu0 0.0
        %974 = vmatpush1.msra.mxu0 %v920
        %975 = vmatprep.subr.mxu0 0.0
        %976 = vmatpush2.msra.mxu0 0.0
        %977 = vmatprep.subr.mxu0 0.0
        %978 = vmatpush2.msra.mxu0 0.0
        %979 = vmatprep.subr.mxu0 0.0
        %980 = vmatpush2.msra.mxu0 0.0
        %981 = vmatprep.subr.mxu0 0.0
        %982 = vmatpush2.msra.mxu0 0.0
        %983 = vmatprep.subr.mxu0 0.0
        %984 = vmatpush2.msra.mxu0 0.0
        %985 = vmatprep.subr.mxu0 0.0
        %986 = vmatpush2.msra.mxu0 0.0
        %987 = vmatprep.subr.mxu0 0.0
        %988 = vmatpush2.msra.mxu0 0.0
        %989 = vmatprep.subr.mxu0 0.0
        %990 = vmatpush2.msra.mxu0 0.0
        %991 = vmatprep.subr.mxu0 0.0
        %992 = vmatpush2.msra.mxu0 0.0
        %993 = vmatprep.subr.mxu0 0.0
        %994 = vmatpush2.msra.mxu0 0.0
        %995 = vmatprep.subr.mxu0 0.0
        %996 = vmatpush2.msra.mxu0 0.0
        %997 = vmatprep.subr.mxu0 0.0
        %998 = vmatpush2.msra.mxu0 0.0
        %999 = vmatprep.subr.mxu0 0.0
        %1000 = vmatpush2.msra.mxu0 0.0
        %1001 = vmatprep.subr.mxu0 0.0
        %1002 = vmatpush2.msra.mxu0 0.0
        %1003 = vmatprep.subr.mxu0 0.0
        %1004 = vmatpush2.msra.mxu0 0.0
        %1005 = vmatprep.subr.mxu0 0.0
        %1006 = vmatpush2.msra.mxu0 0.0
        %1007 = vmatprep.mubr.f32.mxu0 0.0
        %1008 = vmatmul.mubr.f32.gmra.mxu0 %v904
        %v1009 = vpop.f32.mrf.mxu0
        %v1010 = vadd.f32 %v941, %v1009
        %v1011 = vpop.f32.mrf.mxu0
        %1012 = vmatprep.mubr.f32.mxu0 0.0
        %1013 = vmatmul.mubr.f32.gmra.mxu0 %v905
        %v1014 = vpop.f32.mrf.mxu0
        %v1015 = vadd.f32 %v941, %v1014
        %v1016 = vpop.f32.mrf.mxu0
        %1017 = vmatprep.mubr.f32.mxu0 0.0
        %1018 = vmatmul.mubr.f32.gmra.mxu0 %v906
        %v1019 = vpop.f32.mrf.mxu0
        %v1020 = vadd.f32 %v941, %v1019
        %v1021 = vpop.f32.mrf.mxu0
        %1022 = vmatprep.mubr.f32.mxu0 0.0
        %1023 = vmatmul.mubr.f32.gmra.mxu0 %v907
        %v1024 = vpop.f32.mrf.mxu0
        %v1025 = vadd.f32 %v941, %v1024
        %v1026 = vpop.f32.mrf.mxu0
        %1027 = vmatprep.mubr.f32.mxu0 0.0
        %1028 = vmatmul.mubr.f32.gmra.mxu0 %v908
        %v1029 = vpop.f32.mrf.mxu0
        %v1030 = vadd.f32 %v941, %v1029
        %v1031 = vpop.f32.mrf.mxu0
        %1032 = vmatprep.mubr.f32.mxu0 0.0
        %1033 = vmatmul.mubr.f32.gmra.mxu0 %v909
        %v1034 = vpop.f32.mrf.mxu0
        %v1035 = vadd.f32 %v941, %v1034
        %v1036 = vpop.f32.mrf.mxu0
        %1037 = vmatprep.mubr.f32.mxu0 0.0
        %1038 = vmatmul.mubr.f32.gmra.mxu0 %v910
        %v1039 = vpop.f32.mrf.mxu0
        %v1040 = vadd.f32 %v941, %v1039
        %v1041 = vpop.f32.mrf.mxu0
        %1042 = vmatprep.mubr.f32.mxu0 0.0
        %1043 = vmatmul.mubr.f32.gmra.mxu0 %v911
        %v1044 = vpop.f32.mrf.mxu0
        %v1045 = vadd.f32 %v941, %v1044
        %v1046 = vpop.f32.mrf.mxu0
        %1047 = vmatprep.mubr.f32.mxu0 0.0
        %1048 = vmatmul.mubr.f32.gmra.mxu0 %v912
        %v1049 = vpop.f32.mrf.mxu0
        %v1050 = vadd.f32 %v941, %v1049
        %v1051 = vpop.f32.mrf.mxu0
        %1052 = vmatprep.mubr.f32.mxu0 0.0
        %1053 = vmatmul.mubr.f32.gmra.mxu0 %v913
        %v1054 = vpop.f32.mrf.mxu0
        %v1055 = vadd.f32 %v941, %v1054
        %v1056 = vpop.f32.mrf.mxu0
        %1057 = vmatprep.mubr.f32.mxu0 0.0
        %1058 = vmatmul.mubr.f32.gmra.mxu0 %v914
        %v1059 = vpop.f32.mrf.mxu0
        %v1060 = vadd.f32 %v941, %v1059
        %v1061 = vpop.f32.mrf.mxu0
        %1062 = vmatprep.mubr.f32.mxu0 0.0
        %1063 = vmatmul.mubr.f32.gmra.mxu0 %v915
        %v1064 = vpop.f32.mrf.mxu0
        %v1065 = vadd.f32 %v941, %v1064
        %v1066 = vpop.f32.mrf.mxu0
        %1067 = vmatprep.mubr.f32.mxu0 0.0
        %1068 = vmatmul.mubr.f32.gmra.mxu0 %v916
        %v1069 = vpop.f32.mrf.mxu0
        %v1070 = vadd.f32 %v941, %v1069
        %v1071 = vpop.f32.mrf.mxu0
        %1072 = vmatprep.mubr.f32.mxu0 0.0
        %1073 = vmatmul.mubr.f32.gmra.mxu0 %v917
        %v1074 = vpop.f32.mrf.mxu0
        %v1075 = vadd.f32 %v941, %v1074
        %v1076 = vpop.f32.mrf.mxu0
        %1077 = vmatprep.mubr.f32.mxu0 0.0
        %1078 = vmatmul.mubr.f32.gmra.mxu0 %v918
        %v1079 = vpop.f32.mrf.mxu0
        %v1080 = vadd.f32 %v941, %v1079
        %v1081 = vpop.f32.mrf.mxu0
        %1082 = vmatprep.mubr.f32.mxu0 0.0
        %1083 = vmatmul.mubr.f32.gmra.mxu0 %v919
        %v1084 = vpop.f32.mrf.mxu0
        %v1085 = vadd.f32 %v941, %v1084
        %v1086 = vpop.f32.mrf.mxu0
        %1087 = vdwg.mxu0
        %1088 = vst [vmem:[%s272] sm:$0xff] %v1010
        %1089 = vst [vmem:[%s272 + $0x8] sm:$0xff] %v1015
        %1090 = vst [vmem:[%s272 + $0x10] sm:$0xff] %v1020
        %1091 = vst [vmem:[%s272 + $0x18] sm:$0xff] %v1025
        %1092 = vst [vmem:[%s272 + $0x20] sm:$0xff] %v1030
        %1093 = vst [vmem:[%s272 + $0x28] sm:$0xff] %v1035
        %1094 = vst [vmem:[%s272 + $0x30] sm:$0xff] %v1040
        %1095 = vst [vmem:[%s272 + $0x38] sm:$0xff] %v1045
        %1096 = vst [vmem:[%s272 + $0x40] sm:$0xff] %v1050
        %1097 = vst [vmem:[%s272 + $0x48] sm:$0xff] %v1055
        %1098 = vst [vmem:[%s272 + $0x50] sm:$0xff] %v1060
        %1099 = vst [vmem:[%s272 + $0x58] sm:$0xff] %v1065
        %1100 = vst [vmem:[%s272 + $0x60] sm:$0xff] %v1070
        %1101 = vst [vmem:[%s272 + $0x68] sm:$0xff] %v1075
        %1102 = vst [vmem:[%s272 + $0x70] sm:$0xff] %v1080
        %1103 = vst [vmem:[%s272 + $0x78] sm:$0xff] %v1085
        %s1104 = sand.u32 %s181, 1
        %s1105 = scalar_lea.sflag [#allocation3], %s1104
        %s1106 = sand.u32 %s181, 1
        %s1107 = smul.addr %s1106, 128
        %s1108 = scalar_lea.vmem [#allocation2], %s1107
        // Predicated region
        $region49: #{tpu_custom_call.1} parent=47 // pred_check
          %p1109 = pneg %p191
        $region50: #{tpu_custom_call.1} parent=47 // pred_check_branch
          %1111 = sbr.rel (%p1109) target = $region52
        $region51: #{tpu_custom_call.1} parent=47 // pred_region
          %s1112 = smul.u32 16, %s21
          %s1114 = ssub.s32 2048, 2048
          %1115 = vsyncadd %s1105, %s1114
          %s1116 = smul.addr %s1112, 128
          %s1117 = scalar_lea.hbm %s7, %s1116
          %s1118 = sshll.u32 %s1108, 4
          %s1119 = int_to_ptr.vmem [resolvable:$true] %s1118
          %1124 = dma.vmem_to_hbm [thread:$0]  %s1119, 2048, %s1117, %s1105, 128, 128, 8
        $region52: #{tpu_custom_call.1} parent=47 // pred_fallthru
          _
      $region48: #{tpu_custom_call.1} parent=5 // pred_fallthru
        _
      %p1125 = scmp.le.s32.totalorder 2, %s16
      // Predicated region
      $region53: #{tpu_custom_call.1} parent=5 // pred_check
        %p1126 = pneg %p1125
      $region54: #{tpu_custom_call.1} parent=5 // pred_check_branch
        %1128 = sbr.rel (%p1126) target = $region56
      $region55: #{tpu_custom_call.1} parent=5 // pred_region
        %s1129 = ssub.s32 %s16, 2
        // Predicated region
        $region57: #{tpu_custom_call.1} parent=55 // pred_check
          %p1130 = pneg %p197
        $region58: #{tpu_custom_call.1} parent=55 // pred_check_branch
          %1132 = sbr.rel (%p1130) target = $region60
        $region59: #{tpu_custom_call.1} parent=55 // pred_region
          %s1133 = sand.u32 %s182, 1
          %s1134 = scalar_lea.sflag [#allocation3], %s1133
          %s1135 = sand.u32 %s182, 1
          %s1136 = smul.addr %s1135, 128
          %s1137 = scalar_lea.vmem [#allocation2], %s1136
          %1138 = dma.done %s1134, 2048
        $region60: #{tpu_custom_call.1} parent=55 // pred_fallthru
          _
      $region56: #{tpu_custom_call.1} parent=5 // pred_fallthru
        _
    $region6: #{tpu_custom_call.1} parent=1 // loop_footer
      %s20 = sadd.s32 1, %s16
    $region7: #{tpu_custom_call.1} parent=1 // loop_footer_branch
      %15 = sbr.rel target = $region3
    $region8: #{tpu_custom_call.1} parent=1 // loop_exit
      _
    %1139 = vsyncpa [#allocation3], 1
    %s1140 = scalar_lea.sflag [#allocation3], 1
    %1141 = vsyncpa %s1140, 1

// kernel: tpu_custom_call.1
$region0: #{tpu_custom_call.1}
  #allocation0 [shape = 'u32[]', space=smem, size = 0x4, offset = 0x4, fixed_abs, tag = 'smem constant byte address 0x4 - core index']
  #allocation1 [shape = 'u32[144,128]{1,0:T(1,128)}', space=vmem, size = 0x12000, scoped, tag = 'internal scratch']
  %s0 = inlined_call_operand.vmem [shape: f32[512,4], index: 0, kind: input, shape index: {}]
  %s1 = inlined_call_operand.vmem [shape: f32[4,128], index: 1, kind: input, shape index: {}]
  %s2 = inlined_call_operand.vmem [shape: f32[1,128], index: 2, kind: input, shape index: {}]
  %s3 = inlined_call_operand.vmem [shape: f32[128,128], index: 3, kind: input, shape index: {}]
  %s4 = inlined_call_operand.vmem [shape: f32[1,128], index: 4, kind: input, shape index: {}]
  %s5 = inlined_call_operand.vmem [shape: f32[128,128], index: 5, kind: input, shape index: {}]
  %s6 = inlined_call_operand.vmem [shape: f32[1,128], index: 6, kind: input, shape index: {}]
  %s7 = inlined_call_operand.hbm [shape: f32[512,128], index: 7, kind: output, shape index: {}]
  %s8 = sld [smem:[#allocation0]]
  $region61: #{tpu_custom_call.1} parent=0
    _
  %s10 = ssub.s32 1, %s8
  %s11 = scalar_select 0, %s10, %s8
  $region1: #{tpu_custom_call.1} parent=0
    #allocation2 [shape = 'u8[131072]{0}', space=vmem, size = 0x20000, scoped, tag = 'output window, operand 0']
    #allocation3 [shape = 's32[2]{0}', space=sflag, size = 0x8, scoped, tag = 'scoped memory for tpu_custom_call.1']
    %12 = vsyncpa [#allocation3], 0
    %s13 = scalar_lea.sflag [#allocation3], 1
    %14 = vsyncpa %s13, 0
    loop: start=0, step=1, limit=6
    $region2: #{tpu_custom_call.1} parent=1 // loop_pre_header
      _
    $region3: #{tpu_custom_call.1} parent=1 // loop_header
      %s16 = sphi 0, %s20
      %p17 = scmp.ge.s32.totalorder %s16, 6
      %s26 = sphi 0, %s28
      %s29 = sphi 0, %s26
      %s30 = sphi 0, %s29
      %s46 = sphi 0, %s30
      %s50 = sphi 0, %s50
      %s52 = sphi 0, %s50
      %s53 = sphi 0, %s52
      %s67 = sphi 0, %s53
      %s71 = sphi 0, %s71
      %s73 = sphi 0, %s71
      %s74 = sphi 0, %s73
      %s88 = sphi 0, %s74
      %s92 = sphi 0, %s92
      %s94 = sphi 0, %s92
      %s95 = sphi 0, %s94
      %s109 = sphi 0, %s95
      %s113 = sphi 0, %s113
      %s115 = sphi 0, %s113
      %s116 = sphi 0, %s115
      %s130 = sphi 0, %s116
      %s134 = sphi 0, %s134
      %s136 = sphi 0, %s134
      %s137 = sphi 0, %s136
      %s151 = sphi 0, %s137
      %s155 = sphi 0, %s155
      %s157 = sphi 0, %s155
      %s158 = sphi 0, %s157
      %s172 = sphi 0, %s158
      %s178 = sphi 0, %s180
      %s181 = sphi 0, %s178
      %s182 = sphi 0, %s181
      %s198 = sphi 0, %s182
    $region4: #{tpu_custom_call.1} parent=1 // loop_header_branch
      %19 = sbr.rel (%p17) target = $region8
    $region5: #{tpu_custom_call.1} parent=1 // loop_body
      %s21 = ssub.s32 %s16, 1
      %s22 = ssub.s32 %s16, 2
      %s23 = sadd.s32 %s16, 1
      %s24 = ssub.s32 %s16, %s23
      %p25 = scmp.eq.s32.totalorder %s24, 0
      %s27 = sadd.s32 %s26, 1
      %s28 = scalar_select %p25, %s26, %s27
      %p31 = pneg %p25
      %p32 = scmp.eq.s32.totalorder %s16, 3
      %p33 = por %p31, %p32
      %p34 = scmp.ne.s32.totalorder %s26, %s29
      %p35 = scmp.eq.s32.totalorder %s16, 0
      %p36 = por %p34, %p35
      %p37 = scmp.ne.s32.totalorder %s26, %s29
      %p38 = scmp.eq.s32.totalorder %s21, 3
      %p39 = por %p37, %p38
      %p40 = scmp.ne.s32.totalorder %s29, %s30
      %p41 = scmp.eq.s32.totalorder %s21, 0
      %p42 = por %p40, %p41
      %p43 = scmp.ne.s32.totalorder %s29, %s30
      %p44 = scmp.eq.s32.totalorder %s22, 3
      %p45 = por %p43, %p44
      %p47 = scmp.ne.s32.totalorder %s30, %s46
      %p48 = scmp.eq.s32.totalorder %s22, 0
      %p49 = por %p47, %p48
      %s51 = sadd.s32 %s50, 1
      %p54 = scmp.eq.s32.totalorder %s16, 3
      %p55 = scmp.ne.s32.totalorder %s50, %s52
      %p56 = scmp.eq.s32.totalorder %s16, 0
      %p57 = por %p55, %p56
      %p58 = scmp.ne.s32.totalorder %s50, %s52
      %p59 = scmp.eq.s32.totalorder %s21, 3
      %p60 = por %p58, %p59
      %p61 = scmp.ne.s32.totalorder %s52, %s53
      %p62 = scmp.eq.s32.totalorder %s21, 0
      %p63 = por %p61, %p62
      %p64 = scmp.ne.s32.totalorder %s52, %s53
      %p65 = scmp.eq.s32.totalorder %s22, 3
      %p66 = por %p64, %p65
      %p68 = scmp.ne.s32.totalorder %s53, %s67
      %p69 = scmp.eq.s32.totalorder %s22, 0
      %p70 = por %p68, %p69
      %s72 = sadd.s32 %s71, 1
      %p75 = scmp.eq.s32.totalorder %s16, 3
      %p76 = scmp.ne.s32.totalorder %s71, %s73
      %p77 = scmp.eq.s32.totalorder %s16, 0
      %p78 = por %p76, %p77
      %p79 = scmp.ne.s32.totalorder %s71, %s73
      %p80 = scmp.eq.s32.totalorder %s21, 3
      %p81 = por %p79, %p80
      %p82 = scmp.ne.s32.totalorder %s73, %s74
      %p83 = scmp.eq.s32.totalorder %s21, 0
      %p84 = por %p82, %p83
      %p85 = scmp.ne.s32.totalorder %s73, %s74
      %p86 = scmp.eq.s32.totalorder %s22, 3
      %p87 = por %p85, %p86
      %p89 = scmp.ne.s32.totalorder %s74, %s88
      %p90 = scmp.eq.s32.totalorder %s22, 0
      %p91 = por %p89, %p90
      %s93 = sadd.s32 %s92, 1
      %p96 = scmp.eq.s32.totalorder %s16, 3
      %p97 = scmp.ne.s32.totalorder %s92, %s94
      %p98 = scmp.eq.s32.totalorder %s16, 0
      %p99 = por %p97, %p98
      %p100 = scmp.ne.s32.totalorder %s92, %s94
      %p101 = scmp.eq.s32.totalorder %s21, 3
      %p102 = por %p100, %p101
      %p103 = scmp.ne.s32.totalorder %s94, %s95
      %p104 = scmp.eq.s32.totalorder %s21, 0
      %p105 = por %p103, %p104
      %p106 = scmp.ne.s32.totalorder %s94, %s95
      %p107 = scmp.eq.s32.totalorder %s22, 3
      %p108 = por %p106, %p107
      %p110 = scmp.ne.s32.totalorder %s95, %s109
      %p111 = scmp.eq.s32.totalorder %s22, 0
      %p112 = por %p110, %p111
      %s114 = sadd.s32 %s113, 1
      %p117 = scmp.eq.s32.totalorder %s16, 3
      %p118 = scmp.ne.s32.totalorder %s113, %s115
      %p119 = scmp.eq.s32.totalorder %s16, 0
      %p120 = por %p118, %p119
      %p121 = scmp.ne.s32.totalorder %s113, %s115
      %p122 = scmp.eq.s32.totalorder %s21, 3
      %p123 = por %p121, %p122
      %p124 = scmp.ne.s32.totalorder %s115, %s116
      %p125 = scmp.eq.s32.totalorder %s21, 0
      %p126 = por %p124, %p125
      %p127 = scmp.ne.s32.totalorder %s115, %s116
      %p128 = scmp.eq.s32.totalorder %s22, 3
      %p129 = por %p127, %p128
      %p131 = scmp.ne.s32.totalorder %s116, %s130
      %p132 = scmp.eq.s32.totalorder %s22, 0
      %p133 = por %p131, %p132
      %s135 = sadd.s32 %s134, 1
      %p138 = scmp.eq.s32.totalorder %s16, 3
      %p139 = scmp.ne.s32.totalorder %s134, %s136
      %p140 = scmp.eq.s32.totalorder %s16, 0
      %p141 = por %p139, %p140
      %p142 = scmp.ne.s32.totalorder %s134, %s136
      %p143 = scmp.eq.s32.totalorder %s21, 3
      %p144 = por %p142, %p143
      %p145 = scmp.ne.s32.totalorder %s136, %s137
      %p146 = scmp.eq.s32.totalorder %s21, 0
      %p147 = por %p145, %p146
      %p148 = scmp.ne.s32.totalorder %s136, %s137
      %p149 = scmp.eq.s32.totalorder %s22, 3
      %p150 = por %p148, %p149
      %p152 = scmp.ne.s32.totalorder %s137, %s151
      %p153 = scmp.eq.s32.totalorder %s22, 0
      %p154 = por %p152, %p153
      %s156 = sadd.s32 %s155, 1
      %p159 = scmp.eq.s32.totalorder %s16, 3
      %p160 = scmp.ne.s32.totalorder %s155, %s157
      %p161 = scmp.eq.s32.totalorder %s16, 0
      %p162 = por %p160, %p161
      %p163 = scmp.ne.s32.totalorder %s155, %s157
      %p164 = scmp.eq.s32.totalorder %s21, 3
      %p165 = por %p163, %p164
      %p166 = scmp.ne.s32.totalorder %s157, %s158
      %p167 = scmp.eq.s32.totalorder %s21, 0
      %p168 = por %p166, %p167
      %p169 = scmp.ne.s32.totalorder %s157, %s158
      %p170 = scmp.eq.s32.totalorder %s22, 3
      %p171 = por %p169, %p170
      %p173 = scmp.ne.s32.totalorder %s158, %s172
      %p174 = scmp.eq.s32.totalorder %s22, 0
      %p175 = por %p173, %p174
      %s176 = ssub.s32 %s16, %s23
      %p177 = scmp.eq.s32.totalorder %s176, 0
      %s179 = sadd.s32 %s178, 1
      %s180 = scalar_select %p177, %s178, %s179
      %p183 = pneg %p177
      %p184 = scmp.eq.s32.totalorder %s16, 3
      %p185 = por %p183, %p184
      %p186 = scmp.ne.s32.totalorder %s178, %s181
      %p187 = scmp.eq.s32.totalorder %s16, 0
      %p188 = por %p186, %p187
      %p189 = scmp.ne.s32.totalorder %s178, %s181
      %p190 = scmp.eq.s32.totalorder %s21, 3
      %p191 = por %p189, %p190
      %p192 = scmp.ne.s32.totalorder %s181, %s182
      %p193 = scmp.eq.s32.totalorder %s21, 0
      %p194 = por %p192, %p193
      %p195 = scmp.ne.s32.totalorder %s181, %s182
      %p196 = scmp.eq.s32.totalorder %s22, 3
      %p197 = por %p195, %p196
      %p199 = scmp.ne.s32.totalorder %s182, %s198
      %p200 = scmp.eq.s32.totalorder %s22, 0
      %p201 = por %p199, %p200
      %p202 = scmp.le.s32.totalorder 1, %s16
      %p203 = scmp.lt.s32.totalorder %s16, 5
      %p204 = pnand %p202, %p203
      %p205 = pneg %p204
      // Predicated region
      $region9: #{tpu_custom_call.1} parent=5 // pred_check
        _
      $region10: #{tpu_custom_call.1} parent=5 // pred_check_branch
        %207 = sbr.rel (%p204) target = $region12
      $region11: #{tpu_custom_call.1} parent=5 // pred_region
        %s208 = ssub.s32 %s16, 1
        // Predicated region
        $region13: #{tpu_custom_call.1} parent=11 // pred_check
          %p209 = pneg %p63
        $region14: #{tpu_custom_call.1} parent=11 // pred_check_branch
          %211 = sbr.rel (%p209) target = $region16
        $region15: #{tpu_custom_call.1} parent=11 // pred_region
          _
        $region16: #{tpu_custom_call.1} parent=11 // pred_fallthru
          _
        // Predicated region
        $region17: #{tpu_custom_call.1} parent=11 // pred_check
          %p212 = pneg %p84
        $region18: #{tpu_custom_call.1} parent=11 // pred_check_branch
          %214 = sbr.rel (%p212) target = $region20
        $region19: #{tpu_custom_call.1} parent=11 // pred_region
          _
        $region20: #{tpu_custom_call.1} parent=11 // pred_fallthru
          _
        // Predicated region
        $region21: #{tpu_custom_call.1} parent=11 // pred_check
          %p215 = pneg %p105
        $region22: #{tpu_custom_call.1} parent=11 // pred_check_branch
          %217 = sbr.rel (%p215) target = $region24
        $region23: #{tpu_custom_call.1} parent=11 // pred_region
          _
        $region24: #{tpu_custom_call.1} parent=11 // pred_fallthru
          _
        // Predicated region
        $region25: #{tpu_custom_call.1} parent=11 // pred_check
          %p218 = pneg %p126
        $region26: #{tpu_custom_call.1} parent=11 // pred_check_branch
          %220 = sbr.rel (%p218) target = $region28
        $region27: #{tpu_custom_call.1} parent=11 // pred_region
          _
        $region28: #{tpu_custom_call.1} parent=11 // pred_fallthru
          _
        // Predicated region
        $region29: #{tpu_custom_call.1} parent=11 // pred_check
          %p221 = pneg %p147
        $region30: #{tpu_custom_call.1} parent=11 // pred_check_branch
          %223 = sbr.rel (%p221) target = $region32
        $region31: #{tpu_custom_call.1} parent=11 // pred_region
          _
        $region32: #{tpu_custom_call.1} parent=11 // pred_fallthru
          _
        // Predicated region
        $region33: #{tpu_custom_call.1} parent=11 // pred_check
          %p224 = pneg %p168
        $region34: #{tpu_custom_call.1} parent=11 // pred_check_branch
          %226 = sbr.rel (%p224) target = $region36
        $region35: #{tpu_custom_call.1} parent=11 // pred_region
          _
        $region36: #{tpu_custom_call.1} parent=11 // pred_fallthru
          _
      $region12: #{tpu_custom_call.1} parent=5 // pred_fallthru
        _
      %p227 = scmp.lt.s32.totalorder %s16, 4
      // Predicated region
      $region37: #{tpu_custom_call.1} parent=5 // pred_check
        %p228 = pneg %p227
      $region38: #{tpu_custom_call.1} parent=5 // pred_check_branch
        %230 = sbr.rel (%p228) target = $region40
      $region39: #{tpu_custom_call.1} parent=5 // pred_region
        // Predicated region
        $region41: #{tpu_custom_call.1} parent=39 // pred_check
          %p231 = pneg %p36
        $region42: #{tpu_custom_call.1} parent=39 // pred_check_branch
          %233 = sbr.rel (%p231) target = $region44
        $region43: #{tpu_custom_call.1} parent=39 // pred_region
          %s234 = smul.u32 16, %s16
          %p235 = scmp.lt.s32.totalorder %s234, 63
          %s236 = scalar_select %p235, %s234, 63
          %s237 = smul.addr %s236, 8
          %s238 = scalar_lea.vmem %s0, %s237
          %s239 = smul.u32 16, %s16
        $region44: #{tpu_custom_call.1} parent=39 // pred_fallthru
          _
      $region40: #{tpu_custom_call.1} parent=5 // pred_fallthru
        _
      %p240 = scmp.le.s32.totalorder 1, %s16
      %p241 = scmp.lt.s32.totalorder %s16, 5
      %p242 = pnand %p240, %p241
      %p243 = pneg %p242
      // Predicated region
      $region45: #{tpu_custom_call.1} parent=5 // pred_check
        _
      $region46: #{tpu_custom_call.1} parent=5 // pred_check_branch
        %245 = sbr.rel (%p242) target = $region48
      $region47: #{tpu_custom_call.1} parent=5 // pred_region
        %s246 = ssub.s32 %s16, 1
        %s247 = smul.u32 16, %s21
        %p248 = scmp.lt.s32.totalorder %s247, 63
        %s249 = scalar_select %p248, %s247, 63
        %s250 = smul.addr %s249, 8
        %s251 = scalar_lea.vmem %s0, %s250
        %p252 = pneg %p42
        %p253 = pneg %p39
        %p254 = pneg %p63
        %p255 = pneg %p60
        %p256 = pneg %p84
        %p257 = pneg %p81
        %p258 = pneg %p105
        %p259 = pneg %p102
        %p260 = pneg %p126
        %p261 = pneg %p123
        %p262 = pneg %p147
        %p263 = pneg %p144
        %p264 = pneg %p168
        %p265 = pneg %p165
        %p266 = pneg %p194
        %p267 = pneg %p191
        %s268 = sand.u32 %s181, 1
        %s269 = scalar_lea.sflag [#allocation3], %s268
        %s270 = sand.u32 %s181, 1
        %s271 = smul.addr %s270, 128
        %s272 = scalar_lea.vmem [#allocation2], %s271
        %s273 = smul.u32 16, %s21
        %p274 = scmp.lt.s32.totalorder %s273, 63
        %s275 = scalar_select %p274, %s273, 63
        %s276 = smul.addr %s275, 8
        %s277 = scalar_lea.vmem %s0, %s276
        %s278 = smul.u32 16, %s21
        %s279 = smul.u32 16, %s21
        %v280 = vld [vmem:[%s277] sm:$0xff]
        %v281 = vld [vmem:[%s277 + $0x8] sm:$0xff]
        %v282 = vld [vmem:[%s277 + $0x10] sm:$0xff]
        %v283 = vld [vmem:[%s277 + $0x18] sm:$0xff]
        %v284 = vld [vmem:[%s277 + $0x20] sm:$0xff]
        %v285 = vld [vmem:[%s277 + $0x28] sm:$0xff]
        %v286 = vld [vmem:[%s277 + $0x30] sm:$0xff]
        %v287 = vld [vmem:[%s277 + $0x38] sm:$0xff]
        %v288 = vld [vmem:[%s277 + $0x40] sm:$0xff]
        %v289 = vld [vmem:[%s277 + $0x48] sm:$0xff]
        %v290 = vld [vmem:[%s277 + $0x50] sm:$0xff]
        %v291 = vld [vmem:[%s277 + $0x58] sm:$0xff]
        %v292 = vld [vmem:[%s277 + $0x60] sm:$0xff]
        %v293 = vld [vmem:[%s277 + $0x68] sm:$0xff]
        %v294 = vld [vmem:[%s277 + $0x70] sm:$0xff]
        %v295 = vld [vmem:[%s277 + $0x78] sm:$0xff]
        %v296 = vld [vmem:[%s1] sm:$0xf]
        %v297 = vld [vmem:[%s2] sm:$0x1]
        %299 = vset.pattern.permute.xlu0 0
        %300 = vperm.xlu0 %299, %v280
        %v301 = vpop.permute.xlu0 %300
        %304 = vset.pattern.permute.xlu0 0
        %305 = vperm.xlu0 %304, %v281
        %v306 = vpop.permute.xlu0 %305
        %309 = vset.pattern.permute.xlu0 0
        %310 = vperm.xlu0 %309, %v282
        %v311 = vpop.permute.xlu0 %310
        %314 = vset.pattern.permute.xlu0 0
        %315 = vperm.xlu0 %314, %v283
        %v316 = vpop.permute.xlu0 %315
        %319 = vset.pattern.permute.xlu0 0
        %320 = vperm.xlu0 %319, %v284
        %v321 = vpop.permute.xlu0 %320
        %324 = vset.pattern.permute.xlu0 0
        %325 = vperm.xlu0 %324, %v285
        %v326 = vpop.permute.xlu0 %325
        %329 = vset.pattern.permute.xlu0 0
        %330 = vperm.xlu0 %329, %v286
        %v331 = vpop.permute.xlu0 %330
        %334 = vset.pattern.permute.xlu0 0
        %335 = vperm.xlu0 %334, %v287
        %v336 = vpop.permute.xlu0 %335
        %339 = vset.pattern.permute.xlu0 0
        %340 = vperm.xlu0 %339, %v288
        %v341 = vpop.permute.xlu0 %340
        %344 = vset.pattern.permute.xlu0 0
        %345 = vperm.xlu0 %344, %v289
        %v346 = vpop.permute.xlu0 %345
        %349 = vset.pattern.permute.xlu0 0
        %350 = vperm.xlu0 %349, %v290
        %v351 = vpop.permute.xlu0 %350
        %354 = vset.pattern.permute.xlu0 0
        %355 = vperm.xlu0 %354, %v291
        %v356 = vpop.permute.xlu0 %355
        %359 = vset.pattern.permute.xlu0 0
        %360 = vperm.xlu0 %359, %v292
        %v361 = vpop.permute.xlu0 %360
        %364 = vset.pattern.permute.xlu0 0
        %365 = vperm.xlu0 %364, %v293
        %v366 = vpop.permute.xlu0 %365
        %369 = vset.pattern.permute.xlu0 0
        %370 = vperm.xlu0 %369, %v294
        %v371 = vpop.permute.xlu0 %370
        %374 = vset.pattern.permute.xlu0 0
        %375 = vperm.xlu0 %374, %v295
        %v376 = vpop.permute.xlu0 %375
        %v378 = vlaneseq
        %v379 = vshrl.u32 %v378, 7
        %v380 = vsub.s32 0, %v379
        %v381 = vrot.slane %v296, %v380
        %v382 = vmul.f32 %v301, %v381
        %v383 = vmul.f32 %v306, %v381
        %v384 = vmul.f32 %v311, %v381
        %v385 = vmul.f32 %v316, %v381
        %v386 = vmul.f32 %v321, %v381
        %v387 = vmul.f32 %v326, %v381
        %v388 = vmul.f32 %v331, %v381
        %v389 = vmul.f32 %v336, %v381
        %v390 = vmul.f32 %v341, %v381
        %v391 = vmul.f32 %v346, %v381
        %v392 = vmul.f32 %v351, %v381
        %v393 = vmul.f32 %v356, %v381
        %v394 = vmul.f32 %v361, %v381
        %v395 = vmul.f32 %v366, %v381
        %v396 = vmul.f32 %v371, %v381
        %v397 = vmul.f32 %v376, %v381
        %v399 = vlaneseq
        %v400 = vshrl.u32 %v399, 7
        %v401 = vsub.s32 0, %v400
        %v402 = vrot.slane %v297, %v401
        %v404 = vadd.f32 %v402, %v382
        %v405 = vadd.f32 %v402, %v383
        %v406 = vadd.f32 %v402, %v384
        %v407 = vadd.f32 %v402, %v385
        %v408 = vadd.f32 %v402, %v386
        %v409 = vadd.f32 %v402, %v387
        %v410 = vadd.f32 %v402, %v388
        %v411 = vadd.f32 %v402, %v389
        %v412 = vadd.f32 %v402, %v390
        %v413 = vadd.f32 %v402, %v391
        %v414 = vadd.f32 %v402, %v392
        %v415 = vadd.f32 %v402, %v393
        %v416 = vadd.f32 %v402, %v394
        %v417 = vadd.f32 %v402, %v395
        %v418 = vadd.f32 %v402, %v396
        %v419 = vadd.f32 %v402, %v397
        %420 = vset.pattern.permute.xlu0 1
        %421 = vperm.xlu0 %420, %v280
        %v422 = vpop.permute.xlu0 %421
        %424 = vset.pattern.permute.xlu0 1
        %425 = vperm.xlu0 %424, %v281
        %v426 = vpop.permute.xlu0 %425
        %428 = vset.pattern.permute.xlu0 1
        %429 = vperm.xlu0 %428, %v282
        %v430 = vpop.permute.xlu0 %429
        %432 = vset.pattern.permute.xlu0 1
        %433 = vperm.xlu0 %432, %v283
        %v434 = vpop.permute.xlu0 %433
        %436 = vset.pattern.permute.xlu0 1
        %437 = vperm.xlu0 %436, %v284
        %v438 = vpop.permute.xlu0 %437
        %440 = vset.pattern.permute.xlu0 1
        %441 = vperm.xlu0 %440, %v285
        %v442 = vpop.permute.xlu0 %441
        %444 = vset.pattern.permute.xlu0 1
        %445 = vperm.xlu0 %444, %v286
        %v446 = vpop.permute.xlu0 %445
        %448 = vset.pattern.permute.xlu0 1
        %449 = vperm.xlu0 %448, %v287
        %v450 = vpop.permute.xlu0 %449
        %452 = vset.pattern.permute.xlu0 1
        %453 = vperm.xlu0 %452, %v288
        %v454 = vpop.permute.xlu0 %453
        %456 = vset.pattern.permute.xlu0 1
        %457 = vperm.xlu0 %456, %v289
        %v458 = vpop.permute.xlu0 %457
        %460 = vset.pattern.permute.xlu0 1
        %461 = vperm.xlu0 %460, %v290
        %v462 = vpop.permute.xlu0 %461
        %464 = vset.pattern.permute.xlu0 1
        %465 = vperm.xlu0 %464, %v291
        %v466 = vpop.permute.xlu0 %465
        %468 = vset.pattern.permute.xlu0 1
        %469 = vperm.xlu0 %468, %v292
        %v470 = vpop.permute.xlu0 %469
        %472 = vset.pattern.permute.xlu0 1
        %473 = vperm.xlu0 %472, %v293
        %v474 = vpop.permute.xlu0 %473
        %476 = vset.pattern.permute.xlu0 1
        %477 = vperm.xlu0 %476, %v294
        %v478 = vpop.permute.xlu0 %477
        %480 = vset.pattern.permute.xlu0 1
        %481 = vperm.xlu0 %480, %v295
        %v482 = vpop.permute.xlu0 %481
        %v484 = vlaneseq
        %v485 = vshrl.u32 %v484, 7
        %v486 = vsub.s32 1, %v485
        %v487 = vrot.slane %v296, %v486
        %v488 = vmul.f32 %v422, %v487
        %v489 = vmul.f32 %v426, %v487
        %v490 = vmul.f32 %v430, %v487
        %v491 = vmul.f32 %v434, %v487
        %v492 = vmul.f32 %v438, %v487
        %v493 = vmul.f32 %v442, %v487
        %v494 = vmul.f32 %v446, %v487
        %v495 = vmul.f32 %v450, %v487
        %v496 = vmul.f32 %v454, %v487
        %v497 = vmul.f32 %v458, %v487
        %v498 = vmul.f32 %v462, %v487
        %v499 = vmul.f32 %v466, %v487
        %v500 = vmul.f32 %v470, %v487
        %v501 = vmul.f32 %v474, %v487
        %v502 = vmul.f32 %v478, %v487
        %v503 = vmul.f32 %v482, %v487
        %v504 = vadd.f32 %v404, %v488
        %v505 = vadd.f32 %v405, %v489
        %v506 = vadd.f32 %v406, %v490
        %v507 = vadd.f32 %v407, %v491
        %v508 = vadd.f32 %v408, %v492
        %v509 = vadd.f32 %v409, %v493
        %v510 = vadd.f32 %v410, %v494
        %v511 = vadd.f32 %v411, %v495
        %v512 = vadd.f32 %v412, %v496
        %v513 = vadd.f32 %v413, %v497
        %v514 = vadd.f32 %v414, %v498
        %v515 = vadd.f32 %v415, %v499
        %v516 = vadd.f32 %v416, %v500
        %v517 = vadd.f32 %v417, %v501
        %v518 = vadd.f32 %v418, %v502
        %v519 = vadd.f32 %v419, %v503
        %520 = vset.pattern.permute.xlu0 2
        %521 = vperm.xlu0 %520, %v280
        %v522 = vpop.permute.xlu0 %521
        %524 = vset.pattern.permute.xlu0 2
        %525 = vperm.xlu0 %524, %v281
        %v526 = vpop.permute.xlu0 %525
        %528 = vset.pattern.permute.xlu0 2
        %529 = vperm.xlu0 %528, %v282
        %v530 = vpop.permute.xlu0 %529
        %532 = vset.pattern.permute.xlu0 2
        %533 = vperm.xlu0 %532, %v283
        %v534 = vpop.permute.xlu0 %533
        %536 = vset.pattern.permute.xlu0 2
        %537 = vperm.xlu0 %536, %v284
        %v538 = vpop.permute.xlu0 %537
        %540 = vset.pattern.permute.xlu0 2
        %541 = vperm.xlu0 %540, %v285
        %v542 = vpop.permute.xlu0 %541
        %544 = vset.pattern.permute.xlu0 2
        %545 = vperm.xlu0 %544, %v286
        %v546 = vpop.permute.xlu0 %545
        %548 = vset.pattern.permute.xlu0 2
        %549 = vperm.xlu0 %548, %v287
        %v550 = vpop.permute.xlu0 %549
        %552 = vset.pattern.permute.xlu0 2
        %553 = vperm.xlu0 %552, %v288
        %v554 = vpop.permute.xlu0 %553
        %556 = vset.pattern.permute.xlu0 2
        %557 = vperm.xlu0 %556, %v289
        %v558 = vpop.permute.xlu0 %557
        %560 = vset.pattern.permute.xlu0 2
        %561 = vperm.xlu0 %560, %v290
        %v562 = vpop.permute.xlu0 %561
        %564 = vset.pattern.permute.xlu0 2
        %565 = vperm.xlu0 %564, %v291
        %v566 = vpop.permute.xlu0 %565
        %568 = vset.pattern.permute.xlu0 2
        %569 = vperm.xlu0 %568, %v292
        %v570 = vpop.permute.xlu0 %569
        %572 = vset.pattern.permute.xlu0 2
        %573 = vperm.xlu0 %572, %v293
        %v574 = vpop.permute.xlu0 %573
        %576 = vset.pattern.permute.xlu0 2
        %577 = vperm.xlu0 %576, %v294
        %v578 = vpop.permute.xlu0 %577
        %580 = vset.pattern.permute.xlu0 2
        %581 = vperm.xlu0 %580, %v295
        %v582 = vpop.permute.xlu0 %581
        %v584 = vlaneseq
        %v585 = vshrl.u32 %v584, 7
        %v586 = vsub.s32 2, %v585
        %v587 = vrot.slane %v296, %v586
        %v588 = vmul.f32 %v522, %v587
        %v589 = vmul.f32 %v526, %v587
        %v590 = vmul.f32 %v530, %v587
        %v591 = vmul.f32 %v534, %v587
        %v592 = vmul.f32 %v538, %v587
        %v593 = vmul.f32 %v542, %v587
        %v594 = vmul.f32 %v546, %v587
        %v595 = vmul.f32 %v550, %v587
        %v596 = vmul.f32 %v554, %v587
        %v597 = vmul.f32 %v558, %v587
        %v598 = vmul.f32 %v562, %v587
        %v599 = vmul.f32 %v566, %v587
        %v600 = vmul.f32 %v570, %v587
        %v601 = vmul.f32 %v574, %v587
        %v602 = vmul.f32 %v578, %v587
        %v603 = vmul.f32 %v582, %v587
        %v604 = vadd.f32 %v504, %v588
        %v605 = vadd.f32 %v505, %v589
        %v606 = vadd.f32 %v506, %v590
        %v607 = vadd.f32 %v507, %v591
        %v608 = vadd.f32 %v508, %v592
        %v609 = vadd.f32 %v509, %v593
        %v610 = vadd.f32 %v510, %v594
        %v611 = vadd.f32 %v511, %v595
        %v612 = vadd.f32 %v512, %v596
        %v613 = vadd.f32 %v513, %v597
        %v614 = vadd.f32 %v514, %v598
        %v615 = vadd.f32 %v515, %v599
        %v616 = vadd.f32 %v516, %v600
        %v617 = vadd.f32 %v517, %v601
        %v618 = vadd.f32 %v518, %v602
        %v619 = vadd.f32 %v519, %v603
        %620 = vset.pattern.permute.xlu0 3
        %621 = vperm.xlu0 %620, %v280
        %v622 = vpop.permute.xlu0 %621
        %624 = vset.pattern.permute.xlu0 3
        %625 = vperm.xlu0 %624, %v281
        %v626 = vpop.permute.xlu0 %625
        %628 = vset.pattern.permute.xlu0 3
        %629 = vperm.xlu0 %628, %v282
        %v630 = vpop.permute.xlu0 %629
        %632 = vset.pattern.permute.xlu0 3
        %633 = vperm.xlu0 %632, %v283
        %v634 = vpop.permute.xlu0 %633
        %636 = vset.pattern.permute.xlu0 3
        %637 = vperm.xlu0 %636, %v284
        %v638 = vpop.permute.xlu0 %637
        %640 = vset.pattern.permute.xlu0 3
        %641 = vperm.xlu0 %640, %v285
        %v642 = vpop.permute.xlu0 %641
        %644 = vset.pattern.permute.xlu0 3
        %645 = vperm.xlu0 %644, %v286
        %v646 = vpop.permute.xlu0 %645
        %648 = vset.pattern.permute.xlu0 3
        %649 = vperm.xlu0 %648, %v287
        %v650 = vpop.permute.xlu0 %649
        %652 = vset.pattern.permute.xlu0 3
        %653 = vperm.xlu0 %652, %v288
        %v654 = vpop.permute.xlu0 %653
        %656 = vset.pattern.permute.xlu0 3
        %657 = vperm.xlu0 %656, %v289
        %v658 = vpop.permute.xlu0 %657
        %660 = vset.pattern.permute.xlu0 3
        %661 = vperm.xlu0 %660, %v290
        %v662 = vpop.permute.xlu0 %661
        %664 = vset.pattern.permute.xlu0 3
        %665 = vperm.xlu0 %664, %v291
        %v666 = vpop.permute.xlu0 %665
        %668 = vset.pattern.permute.xlu0 3
        %669 = vperm.xlu0 %668, %v292
        %v670 = vpop.permute.xlu0 %669
        %672 = vset.pattern.permute.xlu0 3
        %673 = vperm.xlu0 %672, %v293
        %v674 = vpop.permute.xlu0 %673
        %676 = vset.pattern.permute.xlu0 3
        %677 = vperm.xlu0 %676, %v294
        %v678 = vpop.permute.xlu0 %677
        %680 = vset.pattern.permute.xlu0 3
        %681 = vperm.xlu0 %680, %v295
        %v682 = vpop.permute.xlu0 %681
        %v684 = vlaneseq
        %v685 = vshrl.u32 %v684, 7
        %v686 = vsub.s32 3, %v685
        %v687 = vrot.slane %v296, %v686
        %v688 = vmul.f32 %v622, %v687
        %v689 = vmul.f32 %v626, %v687
        %v690 = vmul.f32 %v630, %v687
        %v691 = vmul.f32 %v634, %v687
        %v692 = vmul.f32 %v638, %v687
        %v693 = vmul.f32 %v642, %v687
        %v694 = vmul.f32 %v646, %v687
        %v695 = vmul.f32 %v650, %v687
        %v696 = vmul.f32 %v654, %v687
        %v697 = vmul.f32 %v658, %v687
        %v698 = vmul.f32 %v662, %v687
        %v699 = vmul.f32 %v666, %v687
        %v700 = vmul.f32 %v670, %v687
        %v701 = vmul.f32 %v674, %v687
        %v702 = vmul.f32 %v678, %v687
        %v703 = vmul.f32 %v682, %v687
        %v704 = vadd.f32 %v604, %v688
        %v705 = vadd.f32 %v605, %v689
        %v706 = vadd.f32 %v606, %v690
        %v707 = vadd.f32 %v607, %v691
        %v708 = vadd.f32 %v608, %v692
        %v709 = vadd.f32 %v609, %v693
        %v710 = vadd.f32 %v610, %v694
        %v711 = vadd.f32 %v611, %v695
        %v712 = vadd.f32 %v612, %v696
        %v713 = vadd.f32 %v613, %v697
        %v714 = vadd.f32 %v614, %v698
        %v715 = vadd.f32 %v615, %v699
        %v716 = vadd.f32 %v616, %v700
        %v717 = vadd.f32 %v617, %v701
        %v718 = vadd.f32 %v618, %v702
        %v719 = vadd.f32 %v619, %v703
        %v720 = vtanh.pop %v704
        %v721 = vtanh.pop %v705
        %v722 = vtanh.pop %v706
        %v723 = vtanh.pop %v707
        %v724 = vtanh.pop %v708
        %v725 = vtanh.pop %v709
        %v726 = vtanh.pop %v710
        %v727 = vtanh.pop %v711
        %v728 = vtanh.pop %v712
        %v729 = vtanh.pop %v713
        %v730 = vtanh.pop %v714
        %v731 = vtanh.pop %v715
        %v732 = vtanh.pop %v716
        %v733 = vtanh.pop %v717
        %v734 = vtanh.pop %v718
        %v735 = vtanh.pop %v719
        %v736 = vld [vmem:[%s3] sm:$0xff]
        %v737 = vld [vmem:[%s3 + $0x8] sm:$0xff]
        %v738 = vld [vmem:[%s3 + $0x10] sm:$0xff]
        %v739 = vld [vmem:[%s3 + $0x18] sm:$0xff]
        %v740 = vld [vmem:[%s3 + $0x20] sm:$0xff]
        %v741 = vld [vmem:[%s3 + $0x28] sm:$0xff]
        %v742 = vld [vmem:[%s3 + $0x30] sm:$0xff]
        %v743 = vld [vmem:[%s3 + $0x38] sm:$0xff]
        %v744 = vld [vmem:[%s3 + $0x40] sm:$0xff]
        %v745 = vld [vmem:[%s3 + $0x48] sm:$0xff]
        %v746 = vld [vmem:[%s3 + $0x50] sm:$0xff]
        %v747 = vld [vmem:[%s3 + $0x58] sm:$0xff]
        %v748 = vld [vmem:[%s3 + $0x60] sm:$0xff]
        %v749 = vld [vmem:[%s3 + $0x68] sm:$0xff]
        %v750 = vld [vmem:[%s3 + $0x70] sm:$0xff]
        %v751 = vld [vmem:[%s3 + $0x78] sm:$0xff]
        %v752 = vld [vmem:[%s4] sm:$0x1]
        %v754 = vlaneseq
        %v755 = vshrl.u32 %v754, 7
        %v756 = vsub.s32 0, %v755
        %v757 = vrot.slane %v752, %v756
        %759 = vmatprep.subr.mxu0 0.0
        %760 = vmatpush1.msra.mxu0 %v751
        %761 = vmatprep.subr.mxu0 0.0
        %762 = vmatpush1.msra.mxu0 %v750
        %763 = vmatprep.subr.mxu0 0.0
        %764 = vmatpush1.msra.mxu0 %v749
        %765 = vmatprep.subr.mxu0 0.0
        %766 = vmatpush1.msra.mxu0 %v748
        %767 = vmatprep.subr.mxu0 0.0
        %768 = vmatpush1.msra.mxu0 %v747
        %769 = vmatprep.subr.mxu0 0.0
        %770 = vmatpush1.msra.mxu0 %v746
        %771 = vmatprep.subr.mxu0 0.0
        %772 = vmatpush1.msra.mxu0 %v745
        %773 = vmatprep.subr.mxu0 0.0
        %774 = vmatpush1.msra.mxu0 %v744
        %775 = vmatprep.subr.mxu0 0.0
        %776 = vmatpush1.msra.mxu0 %v743
        %777 = vmatprep.subr.mxu0 0.0
        %778 = vmatpush1.msra.mxu0 %v742
        %779 = vmatprep.subr.mxu0 0.0
        %780 = vmatpush1.msra.mxu0 %v741
        %781 = vmatprep.subr.mxu0 0.0
        %782 = vmatpush1.msra.mxu0 %v740
        %783 = vmatprep.subr.mxu0 0.0
        %784 = vmatpush1.msra.mxu0 %v739
        %785 = vmatprep.subr.mxu0 0.0
        %786 = vmatpush1.msra.mxu0 %v738
        %787 = vmatprep.subr.mxu0 0.0
        %788 = vmatpush1.msra.mxu0 %v737
        %789 = vmatprep.subr.mxu0 0.0
        %790 = vmatpush1.msra.mxu0 %v736
        %791 = vmatprep.subr.mxu0 0.0
        %792 = vmatpush2.msra.mxu0 0.0
        %793 = vmatprep.subr.mxu0 0.0
        %794 = vmatpush2.msra.mxu0 0.0
        %795 = vmatprep.subr.mxu0 0.0
        %796 = vmatpush2.msra.mxu0 0.0
        %797 = vmatprep.subr.mxu0 0.0
        %798 = vmatpush2.msra.mxu0 0.0
        %799 = vmatprep.subr.mxu0 0.0
        %800 = vmatpush2.msra.mxu0 0.0
        %801 = vmatprep.subr.mxu0 0.0
        %802 = vmatpush2.msra.mxu0 0.0
        %803 = vmatprep.subr.mxu0 0.0
        %804 = vmatpush2.msra.mxu0 0.0
        %805 = vmatprep.subr.mxu0 0.0
        %806 = vmatpush2.msra.mxu0 0.0
        %807 = vmatprep.subr.mxu0 0.0
        %808 = vmatpush2.msra.mxu0 0.0
        %809 = vmatprep.subr.mxu0 0.0
        %810 = vmatpush2.msra.mxu0 0.0
        %811 = vmatprep.subr.mxu0 0.0
        %812 = vmatpush2.msra.mxu0 0.0
        %813 = vmatprep.subr.mxu0 0.0
        %814 = vmatpush2.msra.mxu0 0.0
        %815 = vmatprep.subr.mxu0 0.0
        %816 = vmatpush2.msra.mxu0 0.0
        %817 = vmatprep.subr.mxu0 0.0
        %818 = vmatpush2.msra.mxu0 0.0
        %819 = vmatprep.subr.mxu0 0.0
        %820 = vmatpush2.msra.mxu0 0.0
        %821 = vmatprep.subr.mxu0 0.0
        %822 = vmatpush2.msra.mxu0 0.0
        %823 = vmatprep.mubr.f32.mxu0 0.0
        %824 = vmatmul.mubr.f32.gmra.mxu0 %v720
        %v825 = vpop.f32.mrf.mxu0
        %v826 = vadd.f32 %v757, %v825
        %v827 = vpop.f32.mrf.mxu0
        %828 = vmatprep.mubr.f32.mxu0 0.0
        %829 = vmatmul.mubr.f32.gmra.mxu0 %v721
        %v830 = vpop.f32.mrf.mxu0
        %v831 = vadd.f32 %v757, %v830
        %v832 = vpop.f32.mrf.mxu0
        %833 = vmatprep.mubr.f32.mxu0 0.0
        %834 = vmatmul.mubr.f32.gmra.mxu0 %v722
        %v835 = vpop.f32.mrf.mxu0
        %v836 = vadd.f32 %v757, %v835
        %v837 = vpop.f32.mrf.mxu0
        %838 = vmatprep.mubr.f32.mxu0 0.0
        %839 = vmatmul.mubr.f32.gmra.mxu0 %v723
        %v840 = vpop.f32.mrf.mxu0
        %v841 = vadd.f32 %v757, %v840
        %v842 = vpop.f32.mrf.mxu0
        %843 = vmatprep.mubr.f32.mxu0 0.0
        %844 = vmatmul.mubr.f32.gmra.mxu0 %v724
        %v845 = vpop.f32.mrf.mxu0
        %v846 = vadd.f32 %v757, %v845
        %v847 = vpop.f32.mrf.mxu0
        %848 = vmatprep.mubr.f32.mxu0 0.0
        %849 = vmatmul.mubr.f32.gmra.mxu0 %v725
        %v850 = vpop.f32.mrf.mxu0
        %v851 = vadd.f32 %v757, %v850
        %v852 = vpop.f32.mrf.mxu0
        %853 = vmatprep.mubr.f32.mxu0 0.0
        %854 = vmatmul.mubr.f32.gmra.mxu0 %v726
        %v855 = vpop.f32.mrf.mxu0
        %v856 = vadd.f32 %v757, %v855
        %v857 = vpop.f32.mrf.mxu0
        %858 = vmatprep.mubr.f32.mxu0 0.0
        %859 = vmatmul.mubr.f32.gmra.mxu0 %v727
        %v860 = vpop.f32.mrf.mxu0
        %v861 = vadd.f32 %v757, %v860
        %v862 = vpop.f32.mrf.mxu0
        %863 = vmatprep.mubr.f32.mxu0 0.0
        %864 = vmatmul.mubr.f32.gmra.mxu0 %v728
        %v865 = vpop.f32.mrf.mxu0
        %v866 = vadd.f32 %v757, %v865
        %v867 = vpop.f32.mrf.mxu0
        %868 = vmatprep.mubr.f32.mxu0 0.0
        %869 = vmatmul.mubr.f32.gmra.mxu0 %v729
        %v870 = vpop.f32.mrf.mxu0
        %v871 = vadd.f32 %v757, %v870
        %v872 = vpop.f32.mrf.mxu0
        %873 = vmatprep.mubr.f32.mxu0 0.0
        %874 = vmatmul.mubr.f32.gmra.mxu0 %v730
        %v875 = vpop.f32.mrf.mxu0
        %v876 = vadd.f32 %v757, %v875
        %v877 = vpop.f32.mrf.mxu0
        %878 = vmatprep.mubr.f32.mxu0 0.0
        %879 = vmatmul.mubr.f32.gmra.mxu0 %v731
        %v880 = vpop.f32.mrf.mxu0
        %v881 = vadd.f32 %v757, %v880
        %v882 = vpop.f32.mrf.mxu0
        %883 = vmatprep.mubr.f32.mxu0 0.0
        %884 = vmatmul.mubr.f32.gmra.mxu0 %v732
        %v885 = vpop.f32.mrf.mxu0
        %v886 = vadd.f32 %v757, %v885
        %v887 = vpop.f32.mrf.mxu0
        %888 = vmatprep.mubr.f32.mxu0 0.0
        %889 = vmatmul.mubr.f32.gmra.mxu0 %v733
        %v890 = vpop.f32.mrf.mxu0
        %v891 = vadd.f32 %v757, %v890
        %v892 = vpop.f32.mrf.mxu0
        %893 = vmatprep.mubr.f32.mxu0 0.0
        %894 = vmatmul.mubr.f32.gmra.mxu0 %v734
        %v895 = vpop.f32.mrf.mxu0
        %v896 = vadd.f32 %v757, %v895
        %v897 = vpop.f32.mrf.mxu0
        %898 = vmatprep.mubr.f32.mxu0 0.0
        %899 = vmatmul.mubr.f32.gmra.mxu0 %v735
        %v900 = vpop.f32.mrf.mxu0
        %v901 = vadd.f32 %v757, %v900
        %v902 = vpop.f32.mrf.mxu0
        %903 = vdwg.mxu0
        %v904 = vtanh.pop %v826
        %v905 = vtanh.pop %v831
        %v906 = vtanh.pop %v836
        %v907 = vtanh.pop %v841
        %v908 = vtanh.pop %v846
        %v909 = vtanh.pop %v851
        %v910 = vtanh.pop %v856
        %v911 = vtanh.pop %v861
        %v912 = vtanh.pop %v866
        %v913 = vtanh.pop %v871
        %v914 = vtanh.pop %v876
        %v915 = vtanh.pop %v881
        %v916 = vtanh.pop %v886
        %v917 = vtanh.pop %v891
        %v918 = vtanh.pop %v896
        %v919 = vtanh.pop %v901
        %v920 = vld [vmem:[%s5] sm:$0xff]
        %v921 = vld [vmem:[%s5 + $0x8] sm:$0xff]
        %v922 = vld [vmem:[%s5 + $0x10] sm:$0xff]
        %v923 = vld [vmem:[%s5 + $0x18] sm:$0xff]
        %v924 = vld [vmem:[%s5 + $0x20] sm:$0xff]
        %v925 = vld [vmem:[%s5 + $0x28] sm:$0xff]
        %v926 = vld [vmem:[%s5 + $0x30] sm:$0xff]
        %v927 = vld [vmem:[%s5 + $0x38] sm:$0xff]
        %v928 = vld [vmem:[%s5 + $0x40] sm:$0xff]
        %v929 = vld [vmem:[%s5 + $0x48] sm:$0xff]
        %v930 = vld [vmem:[%s5 + $0x50] sm:$0xff]
        %v931 = vld [vmem:[%s5 + $0x58] sm:$0xff]
        %v932 = vld [vmem:[%s5 + $0x60] sm:$0xff]
        %v933 = vld [vmem:[%s5 + $0x68] sm:$0xff]
        %v934 = vld [vmem:[%s5 + $0x70] sm:$0xff]
        %v935 = vld [vmem:[%s5 + $0x78] sm:$0xff]
        %v936 = vld [vmem:[%s6] sm:$0x1]
        %v938 = vlaneseq
        %v939 = vshrl.u32 %v938, 7
        %v940 = vsub.s32 0, %v939
        %v941 = vrot.slane %v936, %v940
        %943 = vmatprep.subr.mxu0 0.0
        %944 = vmatpush1.msra.mxu0 %v935
        %945 = vmatprep.subr.mxu0 0.0
        %946 = vmatpush1.msra.mxu0 %v934
        %947 = vmatprep.subr.mxu0 0.0
        %948 = vmatpush1.msra.mxu0 %v933
        %949 = vmatprep.subr.mxu0 0.0
        %950 = vmatpush1.msra.mxu0 %v932
        %951 = vmatprep.subr.mxu0 0.0
        %952 = vmatpush1.msra.mxu0 %v931
        %953 = vmatprep.subr.mxu0 0.0
        %954 = vmatpush1.msra.mxu0 %v930
        %955 = vmatprep.subr.mxu0 0.0
        %956 = vmatpush1.msra.mxu0 %v929
        %957 = vmatprep.subr.mxu0 0.0
        %958 = vmatpush1.msra.mxu0 %v928
        %959 = vmatprep.subr.mxu0 0.0
        %960 = vmatpush1.msra.mxu0 %v927
        %961 = vmatprep.subr.mxu0 0.0
        %962 = vmatpush1.msra.mxu0 %v926
        %963 = vmatprep.subr.mxu0 0.0
        %964 = vmatpush1.msra.mxu0 %v925
        %965 = vmatprep.subr.mxu0 0.0
        %966 = vmatpush1.msra.mxu0 %v924
        %967 = vmatprep.subr.mxu0 0.0
        %968 = vmatpush1.msra.mxu0 %v923
        %969 = vmatprep.subr.mxu0 0.0
        %970 = vmatpush1.msra.mxu0 %v922
        %971 = vmatprep.subr.mxu0 0.0
        %972 = vmatpush1.msra.mxu0 %v921
        %973 = vmatprep.subr.mxu0 0.0
        %974 = vmatpush1.msra.mxu0 %v920
        %975 = vmatprep.subr.mxu0 0.0
        %976 = vmatpush2.msra.mxu0 0.0
        %977 = vmatprep.subr.mxu0 0.0
        %978 = vmatpush2.msra.mxu0 0.0
        %979 = vmatprep.subr.mxu0 0.0
        %980 = vmatpush2.msra.mxu0 0.0
        %981 = vmatprep.subr.mxu0 0.0
        %982 = vmatpush2.msra.mxu0 0.0
        %983 = vmatprep.subr.mxu0 0.0
        %984 = vmatpush2.msra.mxu0 0.0
        %985 = vmatprep.subr.mxu0 0.0
        %986 = vmatpush2.msra.mxu0 0.0
        %987 = vmatprep.subr.mxu0 0.0
        %988 = vmatpush2.msra.mxu0 0.0
        %989 = vmatprep.subr.mxu0 0.0
        %990 = vmatpush2.msra.mxu0 0.0
        %991 = vmatprep.subr.mxu0 0.0
        %992 = vmatpush2.msra.mxu0 0.0
        %993 = vmatprep.subr.mxu0 0.0
        %994 = vmatpush2.msra.mxu0 0.0
        %995 = vmatprep.subr.mxu0 0.0
        %996 = vmatpush2.msra.mxu0 0.0
        %997 = vmatprep.subr.mxu0 0.0
        %998 = vmatpush2.msra.mxu0 0.0
        %999 = vmatprep.subr.mxu0 0.0
        %1000 = vmatpush2.msra.mxu0 0.0
        %1001 = vmatprep.subr.mxu0 0.0
        %1002 = vmatpush2.msra.mxu0 0.0
        %1003 = vmatprep.subr.mxu0 0.0
        %1004 = vmatpush2.msra.mxu0 0.0
        %1005 = vmatprep.subr.mxu0 0.0
        %1006 = vmatpush2.msra.mxu0 0.0
        %1007 = vmatprep.mubr.f32.mxu0 0.0
        %1008 = vmatmul.mubr.f32.gmra.mxu0 %v904
        %v1009 = vpop.f32.mrf.mxu0
        %v1010 = vadd.f32 %v941, %v1009
        %v1011 = vpop.f32.mrf.mxu0
        %1012 = vmatprep.mubr.f32.mxu0 0.0
        %1013 = vmatmul.mubr.f32.gmra.mxu0 %v905
        %v1014 = vpop.f32.mrf.mxu0
        %v1015 = vadd.f32 %v941, %v1014
        %v1016 = vpop.f32.mrf.mxu0
        %1017 = vmatprep.mubr.f32.mxu0 0.0
        %1018 = vmatmul.mubr.f32.gmra.mxu0 %v906
        %v1019 = vpop.f32.mrf.mxu0
        %v1020 = vadd.f32 %v941, %v1019
        %v1021 = vpop.f32.mrf.mxu0
        %1022 = vmatprep.mubr.f32.mxu0 0.0
        %1023 = vmatmul.mubr.f32.gmra.mxu0 %v907
        %v1024 = vpop.f32.mrf.mxu0
        %v1025 = vadd.f32 %v941, %v1024
        %v1026 = vpop.f32.mrf.mxu0
        %1027 = vmatprep.mubr.f32.mxu0 0.0
        %1028 = vmatmul.mubr.f32.gmra.mxu0 %v908
        %v1029 = vpop.f32.mrf.mxu0
        %v1030 = vadd.f32 %v941, %v1029
        %v1031 = vpop.f32.mrf.mxu0
        %1032 = vmatprep.mubr.f32.mxu0 0.0
        %1033 = vmatmul.mubr.f32.gmra.mxu0 %v909
        %v1034 = vpop.f32.mrf.mxu0
        %v1035 = vadd.f32 %v941, %v1034
        %v1036 = vpop.f32.mrf.mxu0
        %1037 = vmatprep.mubr.f32.mxu0 0.0
        %1038 = vmatmul.mubr.f32.gmra.mxu0 %v910
        %v1039 = vpop.f32.mrf.mxu0
        %v1040 = vadd.f32 %v941, %v1039
        %v1041 = vpop.f32.mrf.mxu0
        %1042 = vmatprep.mubr.f32.mxu0 0.0
        %1043 = vmatmul.mubr.f32.gmra.mxu0 %v911
        %v1044 = vpop.f32.mrf.mxu0
        %v1045 = vadd.f32 %v941, %v1044
        %v1046 = vpop.f32.mrf.mxu0
        %1047 = vmatprep.mubr.f32.mxu0 0.0
        %1048 = vmatmul.mubr.f32.gmra.mxu0 %v912
        %v1049 = vpop.f32.mrf.mxu0
        %v1050 = vadd.f32 %v941, %v1049
        %v1051 = vpop.f32.mrf.mxu0
        %1052 = vmatprep.mubr.f32.mxu0 0.0
        %1053 = vmatmul.mubr.f32.gmra.mxu0 %v913
        %v1054 = vpop.f32.mrf.mxu0
        %v1055 = vadd.f32 %v941, %v1054
        %v1056 = vpop.f32.mrf.mxu0
        %1057 = vmatprep.mubr.f32.mxu0 0.0
        %1058 = vmatmul.mubr.f32.gmra.mxu0 %v914
        %v1059 = vpop.f32.mrf.mxu0
        %v1060 = vadd.f32 %v941, %v1059
        %v1061 = vpop.f32.mrf.mxu0
        %1062 = vmatprep.mubr.f32.mxu0 0.0
        %1063 = vmatmul.mubr.f32.gmra.mxu0 %v915
        %v1064 = vpop.f32.mrf.mxu0
        %v1065 = vadd.f32 %v941, %v1064
        %v1066 = vpop.f32.mrf.mxu0
        %1067 = vmatprep.mubr.f32.mxu0 0.0
        %1068 = vmatmul.mubr.f32.gmra.mxu0 %v916
        %v1069 = vpop.f32.mrf.mxu0
        %v1070 = vadd.f32 %v941, %v1069
        %v1071 = vpop.f32.mrf.mxu0
        %1072 = vmatprep.mubr.f32.mxu0 0.0
        %1073 = vmatmul.mubr.f32.gmra.mxu0 %v917
        %v1074 = vpop.f32.mrf.mxu0
        %v1075 = vadd.f32 %v941, %v1074
        %v1076 = vpop.f32.mrf.mxu0
        %1077 = vmatprep.mubr.f32.mxu0 0.0
        %1078 = vmatmul.mubr.f32.gmra.mxu0 %v918
        %v1079 = vpop.f32.mrf.mxu0
        %v1080 = vadd.f32 %v941, %v1079
        %v1081 = vpop.f32.mrf.mxu0
        %1082 = vmatprep.mubr.f32.mxu0 0.0
        %1083 = vmatmul.mubr.f32.gmra.mxu0 %v919
        %v1084 = vpop.f32.mrf.mxu0
        %v1085 = vadd.f32 %v941, %v1084
        %v1086 = vpop.f32.mrf.mxu0
        %1087 = vdwg.mxu0
        %1088 = vst [vmem:[%s272] sm:$0xff] %v1010
        %1089 = vst [vmem:[%s272 + $0x8] sm:$0xff] %v1015
        %1090 = vst [vmem:[%s272 + $0x10] sm:$0xff] %v1020
        %1091 = vst [vmem:[%s272 + $0x18] sm:$0xff] %v1025
        %1092 = vst [vmem:[%s272 + $0x20] sm:$0xff] %v1030
        %1093 = vst [vmem:[%s272 + $0x28] sm:$0xff] %v1035
        %1094 = vst [vmem:[%s272 + $0x30] sm:$0xff] %v1040
        %1095 = vst [vmem:[%s272 + $0x38] sm:$0xff] %v1045
        %1096 = vst [vmem:[%s272 + $0x40] sm:$0xff] %v1050
        %1097 = vst [vmem:[%s272 + $0x48] sm:$0xff] %v1055
        %1098 = vst [vmem:[%s272 + $0x50] sm:$0xff] %v1060
        %1099 = vst [vmem:[%s272 + $0x58] sm:$0xff] %v1065
        %1100 = vst [vmem:[%s272 + $0x60] sm:$0xff] %v1070
        %1101 = vst [vmem:[%s272 + $0x68] sm:$0xff] %v1075
        %1102 = vst [vmem:[%s272 + $0x70] sm:$0xff] %v1080
        %1103 = vst [vmem:[%s272 + $0x78] sm:$0xff] %v1085
        %s1104 = sand.u32 %s181, 1
        %s1105 = scalar_lea.sflag [#allocation3], %s1104
        %s1106 = sand.u32 %s181, 1
        %s1107 = smul.addr %s1106, 128
        %s1108 = scalar_lea.vmem [#allocation2], %s1107
        // Predicated region
        $region49: #{tpu_custom_call.1} parent=47 // pred_check
          %p1109 = pneg %p191
        $region50: #{tpu_custom_call.1} parent=47 // pred_check_branch
          %1111 = sbr.rel (%p1109) target = $region52
        $region51: #{tpu_custom_call.1} parent=47 // pred_region
          %s1112 = smul.u32 16, %s21
          %s1114 = ssub.s32 2048, 2048
          %1115 = vsyncadd %s1105, %s1114
          %s1116 = smul.addr %s1112, 128
          %s1117 = scalar_lea.hbm %s7, %s1116
          %s1118 = sshll.u32 %s1108, 4
          %s1119 = int_to_ptr.vmem [resolvable:$true] %s1118
          %1124 = dma.vmem_to_hbm [thread:$0]  %s1119, 2048, %s1117, %s1105, 128, 128, 8
        $region52: #{tpu_custom_call.1} parent=47 // pred_fallthru
          _
      $region48: #{tpu_custom_call.1} parent=5 // pred_fallthru
        _
      %p1125 = scmp.le.s32.totalorder 2, %s16
      // Predicated region
      $region53: #{tpu_custom_call.1} parent=5 // pred_check
        %p1126 = pneg %p1125
      $region54: #{tpu_custom_call.1} parent=5 // pred_check_branch
        %1128 = sbr.rel (%p1126) target = $region56
      $region55: #{tpu_custom_call.1} parent=5 // pred_region
        %s1129 = ssub.s32 %s16, 2
        // Predicated region
        $region57: #{tpu_custom_call.1} parent=55 // pred_check
          %p1130 = pneg %p197
        $region58: #{tpu_custom_call.1} parent=55 // pred_check_branch
          %1132 = sbr.rel (%p1130) target = $region60
        $region59: #{tpu_custom_call.1} parent=55 // pred_region
          %s1133 = sand.u32 %s182, 1
          %s1134 = scalar_lea.sflag [#allocation3], %s1133
          %s1135 = sand.u32 %s182, 1
          %s1136 = smul.addr %s1135, 128
          %s1137 = scalar_lea.vmem [#allocation2], %s1136
          %1138 = dma.done %s1134, 2048
        $region60: #{tpu_custom_call.1} parent=55 // pred_fallthru
          _
      $region56: #{tpu_custom_call.1} parent=5 // pred_fallthru
        _
    $region6: #{tpu_custom_call.1} parent=1 // loop_footer
      %s20 = sadd.s32 1, %s16
    $region7: #{tpu_custom_call.1} parent=1 // loop_footer_branch
      %15 = sbr.rel target = $region3
    $region8: #{tpu_custom_call.1} parent=1 // loop_exit
      _
    %1139 = vsyncpa [#allocation3], 1
    %s1140 = scalar_lea.sflag [#allocation3], 1
    %1141 = vsyncpa %s1140, 1

</llo_original>
